<compile_context>
chip_gen: v7x
topology: tpu7x:2x2x1
jax: 0.10.0
libtpu: 0.0.40
codegen_flags: <defaults>
</compile_context>

<pallas_src>
import functools

import jax
import jax.numpy as jnp
from jax.experimental import pallas as pl
from jax.experimental.pallas import tpu as pltpu


_TIME_CHUNK_MAX = 256      # upper bound on time steps folded into one grid step
_MXU_BF16_MIN_DIM = 256    # cast MXU operands to bf16 only at production dims
_SUBLANE = 8
_LANE = 128


def _round_up(x, m):
    return (x + m - 1) // m * m


@functools.lru_cache(maxsize=None)
def _vmem_budget_bytes():
    """Per-chip VMEM budget (~3/4 of physical): 48 MiB on v7x, 96 MiB on v5e/v6e."""
    try:
        cap = int(pltpu.get_tpu_info().vmem_capacity_bytes)
    except Exception:
        cap = 64 * 1024 * 1024  # conservative (v7x-sized) fallback
    return (cap * 3) // 4


@functools.lru_cache(maxsize=None)
def _single_buffer_supported():
    """Probe whether pipeline_mode=pl.Buffered(1) (single-buffered resident blocks)
    compiles on this jax/Mosaic build; fall back to default double-buffering."""
    try:
        spec = pl.BlockSpec((8, 128), lambda i: (0, 0), pipeline_mode=pl.Buffered(1))

        def _k(x_ref, o_ref):
            o_ref[...] = x_ref[...] + 1.0

        fn = pl.pallas_call(
            _k,
            out_shape=jax.ShapeDtypeStruct((8, 128), jnp.float32),
            grid=(1,),
            in_specs=[spec],
            out_specs=pl.BlockSpec((8, 128), lambda i: (0, 0)),
        )
        jax.jit(fn).lower(jax.ShapeDtypeStruct((8, 128), jnp.float32)).compile()
        return True
    except Exception:
        return False


def _select_time_chunk(B_pad, E, H_pad, x_bytes, weight_bufs, budget):
    """Largest tc such that the per-chunk VMEM footprint fits the budget."""
    fixed = weight_bufs * (E * 4 * H_pad + H_pad * 4 * H_pad) * x_bytes  # weights
    fixed += 2 * 4 * H_pad * 4                 # bias block (double-buffered)
    fixed += 2 * 2 * B_pad * H_pad * 4         # h/c out blocks (double-buffered)
    per_tc = (2 * B_pad * E * x_bytes          # x block (double-buffered)
              + 2 * B_pad * H_pad * 4          # out block (double-buffered)
              + 4 * B_pad * H_pad * 4)         # gx scratch (f32, 4H wide)
    avail = budget - fixed
    tc = int(avail // per_tc) if avail > 0 else _SUBLANE
    return max(_SUBLANE, min(tc, _TIME_CHUNK_MAX))


def _select_unroll(batch, H_pad):
    """Unroll depth bounded by vreg pressure (~64 x 1024 f32 total)."""
    live_f32 = batch * 6 * H_pad  # gates (4H) + h + c live per in-flight step
    return int(max(1, min(8, (48 * 1024) // max(1, live_f32))))


def _pad_gate_cols(mat_t, H, H_pad):
    """(K, 4H) with PyTorch gate order [i|f|g|o] -> (K, 4*H_pad), each gate padded."""
    if H_pad == H:
        return mat_t
    K = mat_t.shape[0]
    m = mat_t.reshape(K, 4, H)
    m = jnp.pad(m, ((0, 0), (0, 0), (0, H_pad - H)))
    return m.reshape(K, 4 * H_pad)


# ---------------------------------------------------------------------------
# Pallas kernel: one grid step == one time chunk of `tc` LSTM steps.
# Gate order follows PyTorch: [input, forget, cell(g), output].
# ---------------------------------------------------------------------------
def _lstm_chunk_kernel(x_ref, w_ih_t_ref, w_hh_t_ref, b_ref,
                       out_ref, h_ref, c_ref,
                       gx_ref, *, tc, batch, seq_len, unroll, mask_tail):
    # h_ref / c_ref (constant index_map) are resident across the grid: they are
    # the cross-chunk recurrent carry and the final (h, c) outputs.
    @pl.when(pl.program_id(0) == 0)
    def _():
        h_ref[...] = jnp.zeros_like(h_ref)
        c_ref[...] = jnp.zeros_like(c_ref)

    H = w_hh_t_ref.shape[0]

    # Phase 1 (non-recurrent): hoisted input projection + bias for the whole
    # chunk -- one lane-dense (tc*batch, E) @ (E, 4H) MXU matmul, f32 accumulate.
    gx_ref[...] = (
        jnp.dot(x_ref[...], w_ih_t_ref[...], preferred_element_type=jnp.float32)
        + b_ref[...])

    w_hh_t = w_hh_t_ref[...]                 # (H, 4H), resident in VMEM
    t0 = pl.program_id(0) * tc               # global time offset of this chunk

    # Phase 2: sequential recurrence; only h @ W_hh^T remains inside the loop.
    # TODO(synk): hold W_hh^T in MXU weight staging regs across the chunk
    # (matmul_push_rhs / matmul_acc_lhs / matmul_pop) to stop re-streaming the
    # same RHS every step when batch << 256 MXU rows.
    def step(t, carry):
        h, c = carry
        row = pl.multiple_of(t * batch, 8)   # batch is asserted % 8 == 0
        gates = gx_ref[pl.ds(row, batch), :] + jnp.dot(
            h.astype(w_hh_t.dtype), w_hh_t, preferred_element_type=jnp.float32)
        i_g = jax.nn.sigmoid(gates[:, 0 * H:1 * H])
        f_g = jax.nn.sigmoid(gates[:, 1 * H:2 * H])
        g_g = jnp.tanh(gates[:, 2 * H:3 * H])
        o_g = jax.nn.sigmoid(gates[:, 3 * H:4 * H])
        c_new = f_g * c + i_g * g_g
        h_new = o_g * jnp.tanh(c_new)
        # Batch-first store: removes the wrapper-side XLA transpose of the output.
        out_ref[:, pl.ds(t, 1), :] = h_new[:, None, :]
        if mask_tail:
            valid = (t0 + t) < seq_len       # freeze carry on padded tail steps
            h_new = jnp.where(valid, h_new, h)
            c_new = jnp.where(valid, c_new, c)
        return (h_new, c_new)

    h_fin, c_fin = jax.lax.fori_loop(0, tc, step, (h_ref[...], c_ref[...]),
                                     unroll=unroll)
    h_ref[...] = h_fin   # written once per chunk (carry + final value)
    c_ref[...] = c_fin


def lstm_pallas(x_2d, w_ih_t, w_hh_t, bias, *, seq_len, seq_len_padded, batch,
                time_chunk, vmem_limit):
    """x_2d: (T_pad*batch, E) time-major rows; w_ih_t: (E, 4H); w_hh_t: (H, 4H);
    bias: (1, 4H).  Returns (out (batch, T_pad, H), h (batch, H), c (batch, H))."""
    assert batch % 8 == 0, "batch must be padded to a multiple of 8"
    tc = time_chunk
    T_pad = seq_len_padded
    assert T_pad % tc == 0
    num_chunks = T_pad // tc
    E = x_2d.shape[1]
    H = w_hh_t.shape[0]

    unroll = _select_unroll(batch, H)
    mask_tail = (T_pad != seq_len)

    kernel = functools.partial(_lstm_chunk_kernel, tc=tc, batch=batch,
                               seq_len=seq_len, unroll=unroll,
                               mask_tail=mask_tail)

    # Resident weights never change block index: single-buffer them if supported.
    weight_kw = {"pipeline_mode": pl.Buffered(1)} if _single_buffer_supported() else {}

    grid_spec = pltpu.PrefetchScalarGridSpec(
        num_scalar_prefetch=0,
        grid=(num_chunks,),
        in_specs=[
            pl.BlockSpec((tc * batch, E), lambda c: (c, 0)),                # x chunk
            pl.BlockSpec((E, 4 * H), lambda c: (0, 0), **weight_kw),        # W_ih^T
            pl.BlockSpec((H, 4 * H), lambda c: (0, 0), **weight_kw),        # W_hh^T
            pl.BlockSpec((1, 4 * H), lambda c: (0, 0)),                     # bias
        ],
        out_specs=[
            pl.BlockSpec((batch, tc, H), lambda c: (0, c, 0)),   # batch-first outputs
            pl.BlockSpec((batch, H), lambda c: (0, 0)),          # final h (resident)
            pl.BlockSpec((batch, H), lambda c: (0, 0)),          # final c (resident)
        ],
        scratch_shapes=[pltpu.VMEM((tc * batch, 4 * H), jnp.float32)],      # gates_x
    )

    return pl.pallas_call(
        kernel,
        out_shape=(jax.ShapeDtypeStruct((batch, T_pad, H), jnp.float32),
                   jax.ShapeDtypeStruct((batch, H), jnp.float32),
                   jax.ShapeDtypeStruct((batch, H), jnp.float32)),
        grid_spec=grid_spec,
        compiler_params=pltpu.CompilerParams(
            dimension_semantics=("arbitrary",),        # recurrence is sequential
            vmem_limit_bytes=int(vmem_limit)),
    )(x_2d, w_ih_t, w_hh_t, bias)


# ---------------------------------------------------------------------------
# Wrapper = Encoder.forward
# ---------------------------------------------------------------------------
@functools.partial(jax.jit, static_argnames=("time_chunk_cap",))
def encoder_forward(tokens, emb_w, w_ih, w_hh, b_ih, b_hh, *, time_chunk_cap=None):
    B, T = tokens.shape
    E = emb_w.shape[1]
    H = w_hh.shape[1]

    # Pad hidden to a 128-lane multiple (gate slices become whole-vreg) and batch
    # to the 8-row f32 sublane.  Padded columns/rows stay exactly zero and are
    # sliced off, so results are unaffected.
    H_pad = _round_up(H, _LANE)
    B_pad = _round_up(max(B, _SUBLANE), _SUBLANE)

    # bf16 MXU operands only at production dims so the small f32 check stays tight.
    mxu_dtype = jnp.bfloat16 if min(E, H) >= _MXU_BF16_MIN_DIM else jnp.float32
    x_bytes = jnp.dtype(mxu_dtype).itemsize

    budget = _vmem_budget_bytes()
    weight_bufs = 1 if _single_buffer_supported() else 2
    cap = _TIME_CHUNK_MAX if time_chunk_cap is None else int(time_chunk_cap)
    tc = min(_select_time_chunk(B_pad, E, H_pad, x_bytes, weight_bufs, budget), cap)
    if T <= tc:
        tc = T                                   # single chunk
    else:
        tc = max(_SUBLANE, (tc // _SUBLANE) * _SUBLANE)
    T_pad = _round_up(T, tc)                     # ragged T: pad + mask, never tc=1

    # Embedding gather fused with the batch_first -> time-major transpose: only
    # the tiny int32 token matrix is transposed.  padding_idx=0 handled by the
    # zeroed row 0 of emb_w.
    x_tbe = jnp.take(emb_w, tokens.T, axis=0)                    # (T, B, E)
    x_tbe = jnp.pad(x_tbe, ((0, T_pad - T), (0, B_pad - B), (0, 0)))
    x_2d = x_tbe.reshape(T_pad * B_pad, E).astype(mxu_dtype)

    w_ih_t = _pad_gate_cols(jnp.transpose(w_ih), H, H_pad).astype(mxu_dtype)  # (E,4Hp)
    w_hh_t = jnp.pad(_pad_gate_cols(jnp.transpose(w_hh), H, H_pad),
                     ((0, H_pad - H), (0, 0))).astype(mxu_dtype)              # (Hp,4Hp)
    bias = _pad_gate_cols((b_ih + b_hh)[None, :], H, H_pad)                   # (1,4Hp) f32

    out_bth, h_last, c_last = lstm_pallas(
        x_2d, w_ih_t, w_hh_t, bias,
        seq_len=T, seq_len_padded=T_pad, batch=B_pad, time_chunk=tc,
        vmem_limit=budget)

    outputs = out_bth[:B, :T, :H]                # already batch-first; no transpose
    hidden = h_last[:B, :H][None]                # (1, B, H)
    cell = c_last[:B, :H][None]                  # (1, B, H)
    return outputs, hidden, cell


# Pure-JAX reference (lax.scan) for correctness checking.
def encoder_ref(tokens, emb_w, w_ih, w_hh, b_ih, b_hh):
    embedded = jnp.take(emb_w, tokens, axis=0)      # (B, T, E)
    H = w_hh.shape[1]
    B = tokens.shape[0]

    def step(carry, x_t):
        h, c = carry
        gates = x_t @ w_ih.T + h @ w_hh.T + b_ih + b_hh
        i = jax.nn.sigmoid(gates[:, 0 * H:1 * H])
        f = jax.nn.sigmoid(gates[:, 1 * H:2 * H])
        g = jnp.tanh(gates[:, 2 * H:3 * H])
        o = jax.nn.sigmoid(gates[:, 3 * H:4 * H])
        c = f * c + i * g
        h = o * jnp.tanh(c)
        return (h, c), h

    init = (jnp.zeros((B, H), jnp.float32), jnp.zeros((B, H), jnp.float32))
    (h_last, c_last), outs = jax.lax.scan(step, init,
                                          jnp.transpose(embedded, (1, 0, 2)))
    return jnp.transpose(outs, (1, 0, 2)), h_last[None], c_last[None]


def _make_params(key, vocab_size, E, H):
    k_emb, k_wih, k_whh, k_bih, k_bhh = jax.random.split(key, 5)
    emb_w = jax.random.normal(k_emb, (vocab_size, E), jnp.float32)
    emb_w = emb_w.at[0].set(0.0)                        # padding_idx=0
    bound = 1.0 / jnp.sqrt(jnp.float32(H))
    w_ih = jax.random.uniform(k_wih, (4 * H, E), jnp.float32, -bound, bound)
    w_hh = jax.random.uniform(k_whh, (4 * H, H), jnp.float32, -bound, bound)
    b_ih = jax.random.uniform(k_bih, (4 * H,), jnp.float32, -bound, bound)
    b_hh = jax.random.uniform(k_bhh, (4 * H,), jnp.float32, -bound, bound)
    return emb_w, w_ih, w_hh, b_ih, b_hh


if __name__ == "__main__":
    _single_buffer_supported()   # warm the probe outside any trace

    # --- Test 1: module-scale shapes (H padded to 128, batch padded to 8). ---
    vocab_size, E, H = 16, 32, 32
    B, T = 2, 8
    key = jax.random.PRNGKey(0)
    k_par, k_tok = jax.random.split(key)
    emb_w, w_ih, w_hh, b_ih, b_hh = _make_params(k_par, vocab_size, E, H)
    tokens = jax.random.randint(k_tok, (B, T), 0, vocab_size, dtype=jnp.int32)

    outputs, hidden, cell = encoder_forward(tokens, emb_w, w_ih, w_hh, b_ih, b_hh)
    jax.block_until_ready((outputs, hidden, cell))
    ref_out, ref_h, ref_c = encoder_ref(tokens, emb_w, w_ih, w_hh, b_ih, b_hh)
    assert outputs.shape == (B, T, H)
    assert hidden.shape == (1, B, H) and cell.shape == (1, B, H)
    assert jnp.allclose(outputs, ref_out, rtol=1e-5, atol=1e-5)
    assert jnp.allclose(hidden, ref_h, rtol=1e-5, atol=1e-5)
    assert jnp.allclose(cell, ref_c, rtol=1e-5, atol=1e-5)

    # --- Test 2: multi-chunk path with ragged T (tail masking) + odd batch. ---
    vocab_size2, E2, H2 = 50, 128, 128
    B2, T2 = 3, 40
    k_par2, k_tok2 = jax.random.split(jax.random.PRNGKey(0), 2)
    emb_w2, w_ih2, w_hh2, b_ih2, b_hh2 = _make_params(k_par2, vocab_size2, E2, H2)
    tokens2 = jax.random.randint(k_tok2, (B2, T2), 0, vocab_size2, dtype=jnp.int32)

    out2, hid2, cell2 = encoder_forward(tokens2, emb_w2, w_ih2, w_hh2, b_ih2, b_hh2,
                                        time_chunk_cap=16)   # force 3 chunks, T_pad=48
    jax.block_until_ready((out2, hid2, cell2))
    r_out2, r_h2, r_c2 = encoder_ref(tokens2, emb_w2, w_ih2, w_hh2, b_ih2, b_hh2)
    assert out2.shape == (B2, T2, H2)
    assert jnp.allclose(out2, r_out2, rtol=5e-4, atol=5e-4)
    assert jnp.allclose(hid2, r_h2, rtol=5e-4, atol=5e-4)
    assert jnp.allclose(cell2, r_c2, rtol=5e-4, atol=5e-4)

    print("KERNEL_OK")
</pallas_src>

<mosaic_0001>
module attributes {stable_mosaic.version = 11 : i64} {
  func.func @_lstm_chunk_kernel(%arg0: i32, %arg1: memref<64x32xf32, #tpu.memory_space<vmem>>, %arg2: memref<32x512xf32, #tpu.memory_space<vmem>>, %arg3: memref<128x512xf32, #tpu.memory_space<vmem>>, %arg4: memref<1x512xf32, #tpu.memory_space<vmem>>, %arg5: memref<8x8x128xf32, #tpu.memory_space<vmem>>, %arg6: memref<8x128xf32, #tpu.memory_space<vmem>>, %arg7: memref<8x128xf32, #tpu.memory_space<vmem>>, %arg8: memref<64x512xf32, #tpu.memory_space<vmem>>) attributes {dimension_semantics = [#tpu.dimension_semantics<arbitrary>], iteration_bounds = array<i64: 1>, scalar_prefetch = 0 : i64, scratch_operands = 1 : i64, tpu.core_type = #tpu.core_type<tc>, window_params = [{transform_indices = @transform_0, window_bounds = array<i64: 64, 32>}, {pipeline_mode = #tpu.pipeline_mode<synchronous>, transform_indices = @transform_1, window_bounds = array<i64: 32, 512>}, {pipeline_mode = #tpu.pipeline_mode<synchronous>, transform_indices = @transform_2, window_bounds = array<i64: 128, 512>}, {pipeline_mode = #tpu.pipeline_mode<synchronous>, transform_indices = @transform_3, window_bounds = array<i64: 1, 512>}, {transform_indices = @transform_4, window_bounds = array<i64: 8, 8, 128>}, {pipeline_mode = #tpu.pipeline_mode<synchronous>, transform_indices = @transform_5, window_bounds = array<i64: 8, 128>}, {pipeline_mode = #tpu.pipeline_mode<synchronous>, transform_indices = @transform_6, window_bounds = array<i64: 8, 128>}]} {
    %c0_i32 = arith.constant 0 : i32
    %0 = arith.cmpi eq, %arg0, %c0_i32 : i32
    %1 = arith.extui %0 : i1 to i32
    %c0_i32_0 = arith.constant 0 : i32
    %2 = arith.cmpi ne, %1, %c0_i32_0 : i32
    scf.if %2 {
      %cst_83 = arith.constant 0.000000e+00 : f32
      %287 = vector.broadcast %cst_83 : f32 to vector<8x128xf32>
      %c0_84 = arith.constant 0 : index
      %c0_85 = arith.constant 0 : index
      %288 = vector.load %arg6[%c0_84, %c0_85] : memref<8x128xf32, #tpu.memory_space<vmem>>, vector<8x128xf32>
      tpu.vector_store %arg6[%c0_84, %c0_85], %287 {strides = array<i32>} : memref<8x128xf32, #tpu.memory_space<vmem>>, vector<8x128xf32>,
      %cst_86 = arith.constant 0.000000e+00 : f32
      %289 = vector.broadcast %cst_86 : f32 to vector<8x128xf32>
      %c0_87 = arith.constant 0 : index
      %c0_88 = arith.constant 0 : index
      %290 = vector.load %arg7[%c0_87, %c0_88] : memref<8x128xf32, #tpu.memory_space<vmem>>, vector<8x128xf32>
      tpu.vector_store %arg7[%c0_87, %c0_88], %289 {strides = array<i32>} : memref<8x128xf32, #tpu.memory_space<vmem>>, vector<8x128xf32>,
    } else {
    }
    %c0 = arith.constant 0 : index
    %c0_1 = arith.constant 0 : index
    %3 = vector.load %arg1[%c0, %c0_1] : memref<64x32xf32, #tpu.memory_space<vmem>>, vector<64x32xf32>
    %c0_2 = arith.constant 0 : index
    %c0_3 = arith.constant 0 : index
    %4 = vector.load %arg2[%c0_2, %c0_3] : memref<32x512xf32, #tpu.memory_space<vmem>>, vector<32x512xf32>
    %cst = arith.constant dense<0.000000e+00> : vector<64x512xf32>
    %5 = tpu.matmul %3, %4, %cst {dimension_numbers = #tpu.dot_dimension_numbers<[1], [0], [0], [1], [0, 0, 1, 1], [], []>} : vector<64x32xf32>, vector<32x512xf32>, vector<64x512xf32> -> vector<64x512xf32>
    %c0_4 = arith.constant 0 : index
    %c0_5 = arith.constant 0 : index
    %6 = vector.load %arg4[%c0_4, %c0_5] : memref<1x512xf32, #tpu.memory_space<vmem>>, vector<1x512xf32>
    %7 = vector.broadcast %6 : vector<1x512xf32> to vector<64x512xf32>
    %8 = arith.addf %5, %7 : vector<64x512xf32>
    %c0_6 = arith.constant 0 : index
    %c0_7 = arith.constant 0 : index
    %9 = vector.load %arg8[%c0_6, %c0_7] : memref<64x512xf32, #tpu.memory_space<vmem>>, vector<64x512xf32>
    tpu.vector_store %arg8[%c0_6, %c0_7], %8 {strides = array<i32>} : memref<64x512xf32, #tpu.memory_space<vmem>>, vector<64x512xf32>,
    %c0_8 = arith.constant 0 : index
    %c0_9 = arith.constant 0 : index
    %10 = vector.load %arg3[%c0_8, %c0_9] : memref<128x512xf32, #tpu.memory_space<vmem>>, vector<128x512xf32>
    %c0_10 = arith.constant 0 : index
    %c0_11 = arith.constant 0 : index
    %11 = vector.load %arg6[%c0_10, %c0_11] : memref<8x128xf32, #tpu.memory_space<vmem>>, vector<8x128xf32>
    %c0_12 = arith.constant 0 : index
    %c0_13 = arith.constant 0 : index
    %12 = vector.load %arg7[%c0_12, %c0_13] : memref<8x128xf32, #tpu.memory_space<vmem>>, vector<8x128xf32>
    %c0_i32_14 = arith.constant 0 : i32
    %c8_i32 = arith.constant 8 : i32
    %13 = arith.muli %c0_i32_14, %c8_i32 : i32
    %14 = tpu.assume_multiple %13, 8 : i32
    %15 = arith.index_cast %14 : i32 to index
    %c0_15 = arith.constant 0 : index
    %16 = vector.load %arg8[%15, %c0_15] : memref<64x512xf32, #tpu.memory_space<vmem>>, vector<8x512xf32>
    %cst_16 = arith.constant dense<0.000000e+00> : vector<8x512xf32>
    %17 = tpu.matmul %11, %10, %cst_16 {dimension_numbers = #tpu.dot_dimension_numbers<[1], [0], [0], [1], [0, 0, 1, 1], [], []>} : vector<8x128xf32>, vector<128x512xf32>, vector<8x512xf32> -> vector<8x512xf32>
    %18 = arith.addf %16, %17 : vector<8x512xf32>
    %19 = vector.extract_strided_slice %18 {offsets = [0, 0], sizes = [8, 128], strides = [1, 1]} : vector<8x512xf32> to vector<8x128xf32>
    %20 = arith.negf %19 : vector<8x128xf32>
    %21 = math.exp %20 : vector<8x128xf32>
    %cst_17 = arith.constant 1.000000e+00 : f32
    %22 = vector.broadcast %cst_17 : f32 to vector<8x128xf32>
    %23 = arith.addf %22, %21 : vector<8x128xf32>
    %24 = arith.divf %22, %23 : vector<8x128xf32>
    %25 = vector.extract_strided_slice %18 {offsets = [0, 128], sizes = [8, 128], strides = [1, 1]} : vector<8x512xf32> to vector<8x128xf32>
    %26 = arith.negf %25 : vector<8x128xf32>
    %27 = math.exp %26 : vector<8x128xf32>
    %cst_18 = arith.constant 1.000000e+00 : f32
    %28 = vector.broadcast %cst_18 : f32 to vector<8x128xf32>
    %29 = arith.addf %28, %27 : vector<8x128xf32>
    %30 = arith.divf %28, %29 : vector<8x128xf32>
    %31 = vector.extract_strided_slice %18 {offsets = [0, 256], sizes = [8, 128], strides = [1, 1]} : vector<8x512xf32> to vector<8x128xf32>
    %32 = math.tanh %31 : vector<8x128xf32>
    %33 = vector.extract_strided_slice %18 {offsets = [0, 384], sizes = [8, 128], strides = [1, 1]} : vector<8x512xf32> to vector<8x128xf32>
    %34 = arith.negf %33 : vector<8x128xf32>
    %35 = math.exp %34 : vector<8x128xf32>
    %cst_19 = arith.constant 1.000000e+00 : f32
    %36 = vector.broadcast %cst_19 : f32 to vector<8x128xf32>
    %37 = arith.addf %36, %35 : vector<8x128xf32>
    %38 = arith.divf %36, %37 : vector<8x128xf32>
    %39 = arith.mulf %30, %12 : vector<8x128xf32>
    %40 = arith.mulf %24, %32 : vector<8x128xf32>
    %41 = arith.addf %39, %40 : vector<8x128xf32>
    %42 = math.tanh %41 : vector<8x128xf32>
    %43 = arith.mulf %38, %42 : vector<8x128xf32>
    %44 = vector.shape_cast %43 : vector<8x128xf32> to vector<8x1x128xf32>
    %c0_20 = arith.constant 0 : index
    %45 = arith.index_cast %c0_i32_14 : i32 to index
    %c0_21 = arith.constant 0 : index
    %46 = vector.load %arg5[%c0_20, %45, %c0_21] : memref<8x8x128xf32, #tpu.memory_space<vmem>>, vector<8x1x128xf32>
    tpu.vector_store %arg5[%c0_20, %45, %c0_21], %44 {strides = array<i32>} : memref<8x8x128xf32, #tpu.memory_space<vmem>>, vector<8x1x128xf32>,
    %c1_i32 = arith.constant 1 : i32
    %c8_i32_22 = arith.constant 8 : i32
    %47 = arith.muli %c1_i32, %c8_i32_22 : i32
    %48 = tpu.assume_multiple %47, 8 : i32
    %49 = arith.index_cast %48 : i32 to index
    %c0_23 = arith.constant 0 : index
    %50 = vector.load %arg8[%49, %c0_23] : memref<64x512xf32, #tpu.memory_space<vmem>>, vector<8x512xf32>
    %cst_24 = arith.constant dense<0.000000e+00> : vector<8x512xf32>
    %51 = tpu.matmul %43, %10, %cst_24 {dimension_numbers = #tpu.dot_dimension_numbers<[1], [0], [0], [1], [0, 0, 1, 1], [], []>} : vector<8x128xf32>, vector<128x512xf32>, vector<8x512xf32> -> vector<8x512xf32>
    %52 = arith.addf %50, %51 : vector<8x512xf32>
    %53 = vector.extract_strided_slice %52 {offsets = [0, 0], sizes = [8, 128], strides = [1, 1]} : vector<8x512xf32> to vector<8x128xf32>
    %54 = arith.negf %53 : vector<8x128xf32>
    %55 = math.exp %54 : vector<8x128xf32>
    %cst_25 = arith.constant 1.000000e+00 : f32
    %56 = vector.broadcast %cst_25 : f32 to vector<8x128xf32>
    %57 = arith.addf %56, %55 : vector<8x128xf32>
    %58 = arith.divf %56, %57 : vector<8x128xf32>
    %59 = vector.extract_strided_slice %52 {offsets = [0, 128], sizes = [8, 128], strides = [1, 1]} : vector<8x512xf32> to vector<8x128xf32>
    %60 = arith.negf %59 : vector<8x128xf32>
    %61 = math.exp %60 : vector<8x128xf32>
    %cst_26 = arith.constant 1.000000e+00 : f32
    %62 = vector.broadcast %cst_26 : f32 to vector<8x128xf32>
    %63 = arith.addf %62, %61 : vector<8x128xf32>
    %64 = arith.divf %62, %63 : vector<8x128xf32>
    %65 = vector.extract_strided_slice %52 {offsets = [0, 256], sizes = [8, 128], strides = [1, 1]} : vector<8x512xf32> to vector<8x128xf32>
    %66 = math.tanh %65 : vector<8x128xf32>
    %67 = vector.extract_strided_slice %52 {offsets = [0, 384], sizes = [8, 128], strides = [1, 1]} : vector<8x512xf32> to vector<8x128xf32>
    %68 = arith.negf %67 : vector<8x128xf32>
    %69 = math.exp %68 : vector<8x128xf32>
    %cst_27 = arith.constant 1.000000e+00 : f32
    %70 = vector.broadcast %cst_27 : f32 to vector<8x128xf32>
    %71 = arith.addf %70, %69 : vector<8x128xf32>
    %72 = arith.divf %70, %71 : vector<8x128xf32>
    %73 = arith.mulf %64, %41 : vector<8x128xf32>
    %74 = arith.mulf %58, %66 : vector<8x128xf32>
    %75 = arith.addf %73, %74 : vector<8x128xf32>
    %76 = math.tanh %75 : vector<8x128xf32>
    %77 = arith.mulf %72, %76 : vector<8x128xf32>
    %78 = vector.shape_cast %77 : vector<8x128xf32> to vector<8x1x128xf32>
    %c0_28 = arith.constant 0 : index
    %79 = arith.index_cast %c1_i32 : i32 to index
    %c0_29 = arith.constant 0 : index
    %80 = vector.load %arg5[%c0_28, %79, %c0_29] : memref<8x8x128xf32, #tpu.memory_space<vmem>>, vector<8x1x128xf32>
    tpu.vector_store %arg5[%c0_28, %79, %c0_29], %78 {strides = array<i32>} : memref<8x8x128xf32, #tpu.memory_space<vmem>>, vector<8x1x128xf32>,
    %c2_i32 = arith.constant 2 : i32
    %c8_i32_30 = arith.constant 8 : i32
    %81 = arith.muli %c2_i32, %c8_i32_30 : i32
    %82 = tpu.assume_multiple %81, 8 : i32
    %83 = arith.index_cast %82 : i32 to index
    %c0_31 = arith.constant 0 : index
    %84 = vector.load %arg8[%83, %c0_31] : memref<64x512xf32, #tpu.memory_space<vmem>>, vector<8x512xf32>
    %cst_32 = arith.constant dense<0.000000e+00> : vector<8x512xf32>
    %85 = tpu.matmul %77, %10, %cst_32 {dimension_numbers = #tpu.dot_dimension_numbers<[1], [0], [0], [1], [0, 0, 1, 1], [], []>} : vector<8x128xf32>, vector<128x512xf32>, vector<8x512xf32> -> vector<8x512xf32>
    %86 = arith.addf %84, %85 : vector<8x512xf32>
    %87 = vector.extract_strided_slice %86 {offsets = [0, 0], sizes = [8, 128], strides = [1, 1]} : vector<8x512xf32> to vector<8x128xf32>
    %88 = arith.negf %87 : vector<8x128xf32>
    %89 = math.exp %88 : vector<8x128xf32>
    %cst_33 = arith.constant 1.000000e+00 : f32
    %90 = vector.broadcast %cst_33 : f32 to vector<8x128xf32>
    %91 = arith.addf %90, %89 : vector<8x128xf32>
    %92 = arith.divf %90, %91 : vector<8x128xf32>
    %93 = vector.extract_strided_slice %86 {offsets = [0, 128], sizes = [8, 128], strides = [1, 1]} : vector<8x512xf32> to vector<8x128xf32>
    %94 = arith.negf %93 : vector<8x128xf32>
    %95 = math.exp %94 : vector<8x128xf32>
    %cst_34 = arith.constant 1.000000e+00 : f32
    %96 = vector.broadcast %cst_34 : f32 to vector<8x128xf32>
    %97 = arith.addf %96, %95 : vector<8x128xf32>
    %98 = arith.divf %96, %97 : vector<8x128xf32>
    %99 = vector.extract_strided_slice %86 {offsets = [0, 256], sizes = [8, 128], strides = [1, 1]} : vector<8x512xf32> to vector<8x128xf32>
    %100 = math.tanh %99 : vector<8x128xf32>
    %101 = vector.extract_strided_slice %86 {offsets = [0, 384], sizes = [8, 128], strides = [1, 1]} : vector<8x512xf32> to vector<8x128xf32>
    %102 = arith.negf %101 : vector<8x128xf32>
    %103 = math.exp %102 : vector<8x128xf32>
    %cst_35 = arith.constant 1.000000e+00 : f32
    %104 = vector.broadcast %cst_35 : f32 to vector<8x128xf32>
    %105 = arith.addf %104, %103 : vector<8x128xf32>
    %106 = arith.divf %104, %105 : vector<8x128xf32>
    %107 = arith.mulf %98, %75 : vector<8x128xf32>
    %108 = arith.mulf %92, %100 : vector<8x128xf32>
    %109 = arith.addf %107, %108 : vector<8x128xf32>
    %110 = math.tanh %109 : vector<8x128xf32>
    %111 = arith.mulf %106, %110 : vector<8x128xf32>
    %112 = vector.shape_cast %111 : vector<8x128xf32> to vector<8x1x128xf32>
    %c0_36 = arith.constant 0 : index
    %113 = arith.index_cast %c2_i32 : i32 to index
    %c0_37 = arith.constant 0 : index
    %114 = vector.load %arg5[%c0_36, %113, %c0_37] : memref<8x8x128xf32, #tpu.memory_space<vmem>>, vector<8x1x128xf32>
    tpu.vector_store %arg5[%c0_36, %113, %c0_37], %112 {strides = array<i32>} : memref<8x8x128xf32, #tpu.memory_space<vmem>>, vector<8x1x128xf32>,
    %c3_i32 = arith.constant 3 : i32
    %c8_i32_38 = arith.constant 8 : i32
    %115 = arith.muli %c3_i32, %c8_i32_38 : i32
    %116 = tpu.assume_multiple %115, 8 : i32
    %117 = arith.index_cast %116 : i32 to index
    %c0_39 = arith.constant 0 : index
    %118 = vector.load %arg8[%117, %c0_39] : memref<64x512xf32, #tpu.memory_space<vmem>>, vector<8x512xf32>
    %cst_40 = arith.constant dense<0.000000e+00> : vector<8x512xf32>
    %119 = tpu.matmul %111, %10, %cst_40 {dimension_numbers = #tpu.dot_dimension_numbers<[1], [0], [0], [1], [0, 0, 1, 1], [], []>} : vector<8x128xf32>, vector<128x512xf32>, vector<8x512xf32> -> vector<8x512xf32>
    %120 = arith.addf %118, %119 : vector<8x512xf32>
    %121 = vector.extract_strided_slice %120 {offsets = [0, 0], sizes = [8, 128], strides = [1, 1]} : vector<8x512xf32> to vector<8x128xf32>
    %122 = arith.negf %121 : vector<8x128xf32>
    %123 = math.exp %122 : vector<8x128xf32>
    %cst_41 = arith.constant 1.000000e+00 : f32
    %124 = vector.broadcast %cst_41 : f32 to vector<8x128xf32>
    %125 = arith.addf %124, %123 : vector<8x128xf32>
    %126 = arith.divf %124, %125 : vector<8x128xf32>
    %127 = vector.extract_strided_slice %120 {offsets = [0, 128], sizes = [8, 128], strides = [1, 1]} : vector<8x512xf32> to vector<8x128xf32>
    %128 = arith.negf %127 : vector<8x128xf32>
    %129 = math.exp %128 : vector<8x128xf32>
    %cst_42 = arith.constant 1.000000e+00 : f32
    %130 = vector.broadcast %cst_42 : f32 to vector<8x128xf32>
    %131 = arith.addf %130, %129 : vector<8x128xf32>
    %132 = arith.divf %130, %131 : vector<8x128xf32>
    %133 = vector.extract_strided_slice %120 {offsets = [0, 256], sizes = [8, 128], strides = [1, 1]} : vector<8x512xf32> to vector<8x128xf32>
    %134 = math.tanh %133 : vector<8x128xf32>
    %135 = vector.extract_strided_slice %120 {offsets = [0, 384], sizes = [8, 128], strides = [1, 1]} : vector<8x512xf32> to vector<8x128xf32>
    %136 = arith.negf %135 : vector<8x128xf32>
    %137 = math.exp %136 : vector<8x128xf32>
    %cst_43 = arith.constant 1.000000e+00 : f32
    %138 = vector.broadcast %cst_43 : f32 to vector<8x128xf32>
    %139 = arith.addf %138, %137 : vector<8x128xf32>
    %140 = arith.divf %138, %139 : vector<8x128xf32>
    %141 = arith.mulf %132, %109 : vector<8x128xf32>
    %142 = arith.mulf %126, %134 : vector<8x128xf32>
    %143 = arith.addf %141, %142 : vector<8x128xf32>
    %144 = math.tanh %143 : vector<8x128xf32>
    %145 = arith.mulf %140, %144 : vector<8x128xf32>
    %146 = vector.shape_cast %145 : vector<8x128xf32> to vector<8x1x128xf32>
    %c0_44 = arith.constant 0 : index
    %147 = arith.index_cast %c3_i32 : i32 to index
    %c0_45 = arith.constant 0 : index
    %148 = vector.load %arg5[%c0_44, %147, %c0_45] : memref<8x8x128xf32, #tpu.memory_space<vmem>>, vector<8x1x128xf32>
    tpu.vector_store %arg5[%c0_44, %147, %c0_45], %146 {strides = array<i32>} : memref<8x8x128xf32, #tpu.memory_space<vmem>>, vector<8x1x128xf32>,
    %c4_i32 = arith.constant 4 : i32
    %c8_i32_46 = arith.constant 8 : i32
    %149 = arith.muli %c4_i32, %c8_i32_46 : i32
    %150 = tpu.assume_multiple %149, 8 : i32
    %151 = arith.index_cast %150 : i32 to index
    %c0_47 = arith.constant 0 : index
    %152 = vector.load %arg8[%151, %c0_47] : memref<64x512xf32, #tpu.memory_space<vmem>>, vector<8x512xf32>
    %cst_48 = arith.constant dense<0.000000e+00> : vector<8x512xf32>
    %153 = tpu.matmul %145, %10, %cst_48 {dimension_numbers = #tpu.dot_dimension_numbers<[1], [0], [0], [1], [0, 0, 1, 1], [], []>} : vector<8x128xf32>, vector<128x512xf32>, vector<8x512xf32> -> vector<8x512xf32>
    %154 = arith.addf %152, %153 : vector<8x512xf32>
    %155 = vector.extract_strided_slice %154 {offsets = [0, 0], sizes = [8, 128], strides = [1, 1]} : vector<8x512xf32> to vector<8x128xf32>
    %156 = arith.negf %155 : vector<8x128xf32>
    %157 = math.exp %156 : vector<8x128xf32>
    %cst_49 = arith.constant 1.000000e+00 : f32
    %158 = vector.broadcast %cst_49 : f32 to vector<8x128xf32>
    %159 = arith.addf %158, %157 : vector<8x128xf32>
    %160 = arith.divf %158, %159 : vector<8x128xf32>
    %161 = vector.extract_strided_slice %154 {offsets = [0, 128], sizes = [8, 128], strides = [1, 1]} : vector<8x512xf32> to vector<8x128xf32>
    %162 = arith.negf %161 : vector<8x128xf32>
    %163 = math.exp %162 : vector<8x128xf32>
    %cst_50 = arith.constant 1.000000e+00 : f32
    %164 = vector.broadcast %cst_50 : f32 to vector<8x128xf32>
    %165 = arith.addf %164, %163 : vector<8x128xf32>
    %166 = arith.divf %164, %165 : vector<8x128xf32>
    %167 = vector.extract_strided_slice %154 {offsets = [0, 256], sizes = [8, 128], strides = [1, 1]} : vector<8x512xf32> to vector<8x128xf32>
    %168 = math.tanh %167 : vector<8x128xf32>
    %169 = vector.extract_strided_slice %154 {offsets = [0, 384], sizes = [8, 128], strides = [1, 1]} : vector<8x512xf32> to vector<8x128xf32>
    %170 = arith.negf %169 : vector<8x128xf32>
    %171 = math.exp %170 : vector<8x128xf32>
    %cst_51 = arith.constant 1.000000e+00 : f32
    %172 = vector.broadcast %cst_51 : f32 to vector<8x128xf32>
    %173 = arith.addf %172, %171 : vector<8x128xf32>
    %174 = arith.divf %172, %173 : vector<8x128xf32>
    %175 = arith.mulf %166, %143 : vector<8x128xf32>
    %176 = arith.mulf %160, %168 : vector<8x128xf32>
    %177 = arith.addf %175, %176 : vector<8x128xf32>
    %178 = math.tanh %177 : vector<8x128xf32>
    %179 = arith.mulf %174, %178 : vector<8x128xf32>
    %180 = vector.shape_cast %179 : vector<8x128xf32> to vector<8x1x128xf32>
    %c0_52 = arith.constant 0 : index
    %181 = arith.index_cast %c4_i32 : i32 to index
    %c0_53 = arith.constant 0 : index
    %182 = vector.load %arg5[%c0_52, %181, %c0_53] : memref<8x8x128xf32, #tpu.memory_space<vmem>>, vector<8x1x128xf32>
    tpu.vector_store %arg5[%c0_52, %181, %c0_53], %180 {strides = array<i32>} : memref<8x8x128xf32, #tpu.memory_space<vmem>>, vector<8x1x128xf32>,
    %c5_i32 = arith.constant 5 : i32
    %c8_i32_54 = arith.constant 8 : i32
    %183 = arith.muli %c5_i32, %c8_i32_54 : i32
    %184 = tpu.assume_multiple %183, 8 : i32
    %185 = arith.index_cast %184 : i32 to index
    %c0_55 = arith.constant 0 : index
    %186 = vector.load %arg8[%185, %c0_55] : memref<64x512xf32, #tpu.memory_space<vmem>>, vector<8x512xf32>
    %cst_56 = arith.constant dense<0.000000e+00> : vector<8x512xf32>
    %187 = tpu.matmul %179, %10, %cst_56 {dimension_numbers = #tpu.dot_dimension_numbers<[1], [0], [0], [1], [0, 0, 1, 1], [], []>} : vector<8x128xf32>, vector<128x512xf32>, vector<8x512xf32> -> vector<8x512xf32>
    %188 = arith.addf %186, %187 : vector<8x512xf32>
    %189 = vector.extract_strided_slice %188 {offsets = [0, 0], sizes = [8, 128], strides = [1, 1]} : vector<8x512xf32> to vector<8x128xf32>
    %190 = arith.negf %189 : vector<8x128xf32>
    %191 = math.exp %190 : vector<8x128xf32>
    %cst_57 = arith.constant 1.000000e+00 : f32
    %192 = vector.broadcast %cst_57 : f32 to vector<8x128xf32>
    %193 = arith.addf %192, %191 : vector<8x128xf32>
    %194 = arith.divf %192, %193 : vector<8x128xf32>
    %195 = vector.extract_strided_slice %188 {offsets = [0, 128], sizes = [8, 128], strides = [1, 1]} : vector<8x512xf32> to vector<8x128xf32>
    %196 = arith.negf %195 : vector<8x128xf32>
    %197 = math.exp %196 : vector<8x128xf32>
    %cst_58 = arith.constant 1.000000e+00 : f32
    %198 = vector.broadcast %cst_58 : f32 to vector<8x128xf32>
    %199 = arith.addf %198, %197 : vector<8x128xf32>
    %200 = arith.divf %198, %199 : vector<8x128xf32>
    %201 = vector.extract_strided_slice %188 {offsets = [0, 256], sizes = [8, 128], strides = [1, 1]} : vector<8x512xf32> to vector<8x128xf32>
    %202 = math.tanh %201 : vector<8x128xf32>
    %203 = vector.extract_strided_slice %188 {offsets = [0, 384], sizes = [8, 128], strides = [1, 1]} : vector<8x512xf32> to vector<8x128xf32>
    %204 = arith.negf %203 : vector<8x128xf32>
    %205 = math.exp %204 : vector<8x128xf32>
    %cst_59 = arith.constant 1.000000e+00 : f32
    %206 = vector.broadcast %cst_59 : f32 to vector<8x128xf32>
    %207 = arith.addf %206, %205 : vector<8x128xf32>
    %208 = arith.divf %206, %207 : vector<8x128xf32>
    %209 = arith.mulf %200, %177 : vector<8x128xf32>
    %210 = arith.mulf %194, %202 : vector<8x128xf32>
    %211 = arith.addf %209, %210 : vector<8x128xf32>
    %212 = math.tanh %211 : vector<8x128xf32>
    %213 = arith.mulf %208, %212 : vector<8x128xf32>
    %214 = vector.shape_cast %213 : vector<8x128xf32> to vector<8x1x128xf32>
    %c0_60 = arith.constant 0 : index
    %215 = arith.index_cast %c5_i32 : i32 to index
    %c0_61 = arith.constant 0 : index
    %216 = vector.load %arg5[%c0_60, %215, %c0_61] : memref<8x8x128xf32, #tpu.memory_space<vmem>>, vector<8x1x128xf32>
    tpu.vector_store %arg5[%c0_60, %215, %c0_61], %214 {strides = array<i32>} : memref<8x8x128xf32, #tpu.memory_space<vmem>>, vector<8x1x128xf32>,
    %c6_i32 = arith.constant 6 : i32
    %c8_i32_62 = arith.constant 8 : i32
    %217 = arith.muli %c6_i32, %c8_i32_62 : i32
    %218 = tpu.assume_multiple %217, 8 : i32
    %219 = arith.index_cast %218 : i32 to index
    %c0_63 = arith.constant 0 : index
    %220 = vector.load %arg8[%219, %c0_63] : memref<64x512xf32, #tpu.memory_space<vmem>>, vector<8x512xf32>
    %cst_64 = arith.constant dense<0.000000e+00> : vector<8x512xf32>
    %221 = tpu.matmul %213, %10, %cst_64 {dimension_numbers = #tpu.dot_dimension_numbers<[1], [0], [0], [1], [0, 0, 1, 1], [], []>} : vector<8x128xf32>, vector<128x512xf32>, vector<8x512xf32> -> vector<8x512xf32>
    %222 = arith.addf %220, %221 : vector<8x512xf32>
    %223 = vector.extract_strided_slice %222 {offsets = [0, 0], sizes = [8, 128], strides = [1, 1]} : vector<8x512xf32> to vector<8x128xf32>
    %224 = arith.negf %223 : vector<8x128xf32>
    %225 = math.exp %224 : vector<8x128xf32>
    %cst_65 = arith.constant 1.000000e+00 : f32
    %226 = vector.broadcast %cst_65 : f32 to vector<8x128xf32>
    %227 = arith.addf %226, %225 : vector<8x128xf32>
    %228 = arith.divf %226, %227 : vector<8x128xf32>
    %229 = vector.extract_strided_slice %222 {offsets = [0, 128], sizes = [8, 128], strides = [1, 1]} : vector<8x512xf32> to vector<8x128xf32>
    %230 = arith.negf %229 : vector<8x128xf32>
    %231 = math.exp %230 : vector<8x128xf32>
    %cst_66 = arith.constant 1.000000e+00 : f32
    %232 = vector.broadcast %cst_66 : f32 to vector<8x128xf32>
    %233 = arith.addf %232, %231 : vector<8x128xf32>
    %234 = arith.divf %232, %233 : vector<8x128xf32>
    %235 = vector.extract_strided_slice %222 {offsets = [0, 256], sizes = [8, 128], strides = [1, 1]} : vector<8x512xf32> to vector<8x128xf32>
    %236 = math.tanh %235 : vector<8x128xf32>
    %237 = vector.extract_strided_slice %222 {offsets = [0, 384], sizes = [8, 128], strides = [1, 1]} : vector<8x512xf32> to vector<8x128xf32>
    %238 = arith.negf %237 : vector<8x128xf32>
    %239 = math.exp %238 : vector<8x128xf32>
    %cst_67 = arith.constant 1.000000e+00 : f32
    %240 = vector.broadcast %cst_67 : f32 to vector<8x128xf32>
    %241 = arith.addf %240, %239 : vector<8x128xf32>
    %242 = arith.divf %240, %241 : vector<8x128xf32>
    %243 = arith.mulf %234, %211 : vector<8x128xf32>
    %244 = arith.mulf %228, %236 : vector<8x128xf32>
    %245 = arith.addf %243, %244 : vector<8x128xf32>
    %246 = math.tanh %245 : vector<8x128xf32>
    %247 = arith.mulf %242, %246 : vector<8x128xf32>
    %248 = vector.shape_cast %247 : vector<8x128xf32> to vector<8x1x128xf32>
    %c0_68 = arith.constant 0 : index
    %249 = arith.index_cast %c6_i32 : i32 to index
    %c0_69 = arith.constant 0 : index
    %250 = vector.load %arg5[%c0_68, %249, %c0_69] : memref<8x8x128xf32, #tpu.memory_space<vmem>>, vector<8x1x128xf32>
    tpu.vector_store %arg5[%c0_68, %249, %c0_69], %248 {strides = array<i32>} : memref<8x8x128xf32, #tpu.memory_space<vmem>>, vector<8x1x128xf32>,
    %c7_i32 = arith.constant 7 : i32
    %c8_i32_70 = arith.constant 8 : i32
    %251 = arith.muli %c7_i32, %c8_i32_70 : i32
    %252 = tpu.assume_multiple %251, 8 : i32
    %253 = arith.index_cast %252 : i32 to index
    %c0_71 = arith.constant 0 : index
    %254 = vector.load %arg8[%253, %c0_71] : memref<64x512xf32, #tpu.memory_space<vmem>>, vector<8x512xf32>
    %cst_72 = arith.constant dense<0.000000e+00> : vector<8x512xf32>
    %255 = tpu.matmul %247, %10, %cst_72 {dimension_numbers = #tpu.dot_dimension_numbers<[1], [0], [0], [1], [0, 0, 1, 1], [], []>} : vector<8x128xf32>, vector<128x512xf32>, vector<8x512xf32> -> vector<8x512xf32>
    %256 = arith.addf %254, %255 : vector<8x512xf32>
    %257 = vector.extract_strided_slice %256 {offsets = [0, 0], sizes = [8, 128], strides = [1, 1]} : vector<8x512xf32> to vector<8x128xf32>
    %258 = arith.negf %257 : vector<8x128xf32>
    %259 = math.exp %258 : vector<8x128xf32>
    %cst_73 = arith.constant 1.000000e+00 : f32
    %260 = vector.broadcast %cst_73 : f32 to vector<8x128xf32>
    %261 = arith.addf %260, %259 : vector<8x128xf32>
    %262 = arith.divf %260, %261 : vector<8x128xf32>
    %263 = vector.extract_strided_slice %256 {offsets = [0, 128], sizes = [8, 128], strides = [1, 1]} : vector<8x512xf32> to vector<8x128xf32>
    %264 = arith.negf %263 : vector<8x128xf32>
    %265 = math.exp %264 : vector<8x128xf32>
    %cst_74 = arith.constant 1.000000e+00 : f32
    %266 = vector.broadcast %cst_74 : f32 to vector<8x128xf32>
    %267 = arith.addf %266, %265 : vector<8x128xf32>
    %268 = arith.divf %266, %267 : vector<8x128xf32>
    %269 = vector.extract_strided_slice %256 {offsets = [0, 256], sizes = [8, 128], strides = [1, 1]} : vector<8x512xf32> to vector<8x128xf32>
    %270 = math.tanh %269 : vector<8x128xf32>
    %271 = vector.extract_strided_slice %256 {offsets = [0, 384], sizes = [8, 128], strides = [1, 1]} : vector<8x512xf32> to vector<8x128xf32>
    %272 = arith.negf %271 : vector<8x128xf32>
    %273 = math.exp %272 : vector<8x128xf32>
    %cst_75 = arith.constant 1.000000e+00 : f32
    %274 = vector.broadcast %cst_75 : f32 to vector<8x128xf32>
    %275 = arith.addf %274, %273 : vector<8x128xf32>
    %276 = arith.divf %274, %275 : vector<8x128xf32>
    %277 = arith.mulf %268, %245 : vector<8x128xf32>
    %278 = arith.mulf %262, %270 : vector<8x128xf32>
    %279 = arith.addf %277, %278 : vector<8x128xf32>
    %280 = math.tanh %279 : vector<8x128xf32>
    %281 = arith.mulf %276, %280 : vector<8x128xf32>
    %282 = vector.shape_cast %281 : vector<8x128xf32> to vector<8x1x128xf32>
    %c0_76 = arith.constant 0 : index
    %283 = arith.index_cast %c7_i32 : i32 to index
    %c0_77 = arith.constant 0 : index
    %284 = vector.load %arg5[%c0_76, %283, %c0_77] : memref<8x8x128xf32, #tpu.memory_space<vmem>>, vector<8x1x128xf32>
    tpu.vector_store %arg5[%c0_76, %283, %c0_77], %282 {strides = array<i32>} : memref<8x8x128xf32, #tpu.memory_space<vmem>>, vector<8x1x128xf32>,
    %c8_i32_78 = arith.constant 8 : i32
    %c0_79 = arith.constant 0 : index
    %c0_80 = arith.constant 0 : index
    %285 = vector.load %arg6[%c0_79, %c0_80] : memref<8x128xf32, #tpu.memory_space<vmem>>, vector<8x128xf32>
    tpu.vector_store %arg6[%c0_79, %c0_80], %281 {strides = array<i32>} : memref<8x128xf32, #tpu.memory_space<vmem>>, vector<8x128xf32>,
    %c0_81 = arith.constant 0 : index
    %c0_82 = arith.constant 0 : index
    %286 = vector.load %arg7[%c0_81, %c0_82] : memref<8x128xf32, #tpu.memory_space<vmem>>, vector<8x128xf32>
    tpu.vector_store %arg7[%c0_81, %c0_82], %279 {strides = array<i32>} : memref<8x128xf32, #tpu.memory_space<vmem>>, vector<8x128xf32>,
    return
  }
  func.func @transform_0(%arg0: i32) -> (i32, i32) {
    %c0_i32 = arith.constant 0 : i32
    %c0_i32_0 = arith.constant 0 : i32
    return %arg0, %c0_i32 : i32, i32
  }
  func.func @transform_1(%arg0: i32) -> (i32, i32) {
    %c0_i32 = arith.constant 0 : i32
    %c0_i32_0 = arith.constant 0 : i32
    %c0_i32_1 = arith.constant 0 : i32
    return %c0_i32, %c0_i32_0 : i32, i32
  }
  func.func @transform_2(%arg0: i32) -> (i32, i32) {
    %c0_i32 = arith.constant 0 : i32
    %c0_i32_0 = arith.constant 0 : i32
    %c0_i32_1 = arith.constant 0 : i32
    return %c0_i32, %c0_i32_0 : i32, i32
  }
  func.func @transform_3(%arg0: i32) -> (i32, i32) {
    %c0_i32 = arith.constant 0 : i32
    %c0_i32_0 = arith.constant 0 : i32
    %c0_i32_1 = arith.constant 0 : i32
    return %c0_i32, %c0_i32_0 : i32, i32
  }
  func.func @transform_4(%arg0: i32) -> (i32, i32, i32) {
    %c0_i32 = arith.constant 0 : i32
    %c0_i32_0 = arith.constant 0 : i32
    %c0_i32_1 = arith.constant 0 : i32
    return %c0_i32, %arg0, %c0_i32_0 : i32, i32, i32
  }
  func.func @transform_5(%arg0: i32) -> (i32, i32) {
    %c0_i32 = arith.constant 0 : i32
    %c0_i32_0 = arith.constant 0 : i32
    %c0_i32_1 = arith.constant 0 : i32
    return %c0_i32, %c0_i32_0 : i32, i32
  }
  func.func @transform_6(%arg0: i32) -> (i32, i32) {
    %c0_i32 = arith.constant 0 : i32
    %c0_i32_0 = arith.constant 0 : i32
    %c0_i32_1 = arith.constant 0 : i32
    return %c0_i32, %c0_i32_0 : i32, i32
  }
}

</mosaic_0001>

<llo_original>
// kernel: encoder_forward.1
$region0: #{encoder_forward.1}
  #allocation0 [shape = 'u32[]', space=smem, size = 0x4, offset = 0x4, fixed_abs, tag = 'smem constant byte address 0x4 - core index']
  #allocation1 [shape = 'u32[144,128]{1,0:T(1,128)}', space=vmem, size = 0x12000, scoped, tag = 'internal scratch']
  #allocation2 [shape = 'f32[64,512]{1,0:T(8,128)}', space=vmem, size = 0x20000, scoped, tag = 'scratch operand']
  %s0 = inlined_call_operand.vmem [shape: f32[64,32], index: 0, kind: input, shape index: {}]
  %s1 = inlined_call_operand.vmem [shape: f32[32,512], index: 1, kind: input, shape index: {}]
  %s2 = inlined_call_operand.vmem [shape: f32[128,512], index: 2, kind: input, shape index: {}]
  %s3 = inlined_call_operand.vmem [shape: f32[1,512], index: 3, kind: input, shape index: {}]
  %s4 = inlined_call_operand.vmem [shape: f32[8,8,128], index: 4, kind: output, shape index: {0}]
  %s5 = inlined_call_operand.vmem [shape: f32[8,128], index: 5, kind: output, shape index: {1}]
  %s6 = inlined_call_operand.vmem [shape: f32[8,128], index: 6, kind: output, shape index: {2}]
  %7 = xla_tuple %s4, %s5, %s6
  %s8 = sld [smem:[#allocation0]]
  $region46: #{encoder_forward.1} parent=0
    _
  %s10 = ssub.s32 1, %s8
  %s11 = scalar_select 0, %s10, %s8
  // Predicated region
  $region2: #{encoder_forward.1} parent=0 // pred_check
    _
  $region3: #{encoder_forward.1} parent=0 // pred_check_branch
    %13 = sbr.rel (0) target = $region5
  $region4: #{encoder_forward.1} parent=0 // pred_region
    _
  $region5: #{encoder_forward.1} parent=0 // pred_fallthru
    _
  // Predicated region
  $region6: #{encoder_forward.1} parent=0 // pred_check
    _
  $region7: #{encoder_forward.1} parent=0 // pred_check_branch
    %15 = sbr.rel (0) target = $region9
  $region8: #{encoder_forward.1} parent=0 // pred_region
    _
  $region9: #{encoder_forward.1} parent=0 // pred_fallthru
    _
  // Predicated region
  $region10: #{encoder_forward.1} parent=0 // pred_check
    _
  $region11: #{encoder_forward.1} parent=0 // pred_check_branch
    %17 = sbr.rel (0) target = $region13
  $region12: #{encoder_forward.1} parent=0 // pred_region
    _
  $region13: #{encoder_forward.1} parent=0 // pred_fallthru
    _
  // Predicated region
  $region14: #{encoder_forward.1} parent=0 // pred_check
    _
  $region15: #{encoder_forward.1} parent=0 // pred_check_branch
    %19 = sbr.rel (0) target = $region17
  $region16: #{encoder_forward.1} parent=0 // pred_region
    _
  $region17: #{encoder_forward.1} parent=0 // pred_fallthru
    _
  %p20 = scmp.eq.s32.totalorder 0, 0
  // Predicated region
  $region18: #{encoder_forward.1} parent=0 // pred_check
    %p21 = pneg %p20
  $region19: #{encoder_forward.1} parent=0 // pred_check_branch
    %23 = sbr.rel (%p21) target = $region21
  $region20: #{encoder_forward.1} parent=0 // pred_region
    %24 = vst [vmem:[%s5] sm:$0xff] 0.0
    %25 = vst [vmem:[%s6] sm:$0xff] 0.0
  $region21: #{encoder_forward.1} parent=0 // pred_fallthru
    _
  %v26 = vld [vmem:[%s0] sm:$0xff]
  %v27 = vld [vmem:[%s0 + $0x8] sm:$0xff]
  %v28 = vld [vmem:[%s0 + $0x10] sm:$0xff]
  %v29 = vld [vmem:[%s0 + $0x18] sm:$0xff]
  %v30 = vld [vmem:[%s0 + $0x20] sm:$0xff]
  %v31 = vld [vmem:[%s0 + $0x28] sm:$0xff]
  %v32 = vld [vmem:[%s0 + $0x30] sm:$0xff]
  %v33 = vld [vmem:[%s0 + $0x38] sm:$0xff]
  %v34 = vld [vmem:[%s1] sm:$0xff]
  %v35 = vld [vmem:[%s1 + $0x8] sm:$0xff]
  %v36 = vld [vmem:[%s1 + $0x10] sm:$0xff]
  %v37 = vld [vmem:[%s1 + $0x18] sm:$0xff]
  %v38 = vld [vmem:[%s1 + $0x20] sm:$0xff]
  %v39 = vld [vmem:[%s1 + $0x28] sm:$0xff]
  %v40 = vld [vmem:[%s1 + $0x30] sm:$0xff]
  %v41 = vld [vmem:[%s1 + $0x38] sm:$0xff]
  %v42 = vld [vmem:[%s1 + $0x40] sm:$0xff]
  %v43 = vld [vmem:[%s1 + $0x48] sm:$0xff]
  %v44 = vld [vmem:[%s1 + $0x50] sm:$0xff]
  %v45 = vld [vmem:[%s1 + $0x58] sm:$0xff]
  %v46 = vld [vmem:[%s1 + $0x60] sm:$0xff]
  %v47 = vld [vmem:[%s1 + $0x68] sm:$0xff]
  %v48 = vld [vmem:[%s1 + $0x70] sm:$0xff]
  %v49 = vld [vmem:[%s1 + $0x78] sm:$0xff]
  %v50 = vld [vmem:[%s3] sm:$0xf]
  %v52 = vlaneseq
  %v53 = vshrl.u32 %v52, 7
  %v54 = vsub.s32 0, %v53
  %v55 = vrot.slane %v50, %v54
  %v56 = vlaneseq
  %v57 = vshrl.u32 %v56, 7
  %v58 = vsub.s32 1, %v57
  %v59 = vrot.slane %v50, %v58
  %v60 = vlaneseq
  %v61 = vshrl.u32 %v60, 7
  %v62 = vsub.s32 2, %v61
  %v63 = vrot.slane %v50, %v62
  %v64 = vlaneseq
  %v65 = vshrl.u32 %v64, 7
  %v66 = vsub.s32 3, %v65
  %v67 = vrot.slane %v50, %v66
  %vm72 = vcmask 261120
  %v74 = vsel %vm72, %v26, 0
  %v77 = vsel %vm72, %v27, 0
  %v80 = vsel %vm72, %v28, 0
  %v83 = vsel %vm72, %v29, 0
  %v86 = vsel %vm72, %v30, 0
  %v89 = vsel %vm72, %v31, 0
  %v92 = vsel %vm72, %v32, 0
  %v95 = vsel %vm72, %v33, 0
  %97 = vmatprep.subr.mxu0 %v35
  %98 = vmatpush1.msra.mxu0 %v34
  %99 = vmatprep.subr.mxu0 %v39
  %100 = vmatpush1.msra.mxu0 %v38
  %101 = vmatprep.subr.mxu0 %v43
  %102 = vmatpush1.msra.mxu0 %v42
  %103 = vmatprep.subr.mxu0 %v47
  %104 = vmatpush1.msra.mxu0 %v46
  %105 = vmatprep.subr.mxu0 0.0
  %106 = vmatpush1.msra.mxu0 0.0
  %107 = vmatprep.subr.mxu0 0.0
  %108 = vmatpush1.msra.mxu0 0.0
  %109 = vmatprep.subr.mxu0 0.0
  %110 = vmatpush1.msra.mxu0 0.0
  %111 = vmatprep.subr.mxu0 0.0
  %112 = vmatpush1.msra.mxu0 0.0
  %113 = vmatprep.subr.mxu0 0.0
  %114 = vmatpush1.msra.mxu0 0.0
  %115 = vmatprep.subr.mxu0 0.0
  %116 = vmatpush1.msra.mxu0 0.0
  %117 = vmatprep.subr.mxu0 0.0
  %118 = vmatpush1.msra.mxu0 0.0
  %119 = vmatprep.subr.mxu0 0.0
  %120 = vmatpush1.msra.mxu0 0.0
  %121 = vmatprep.subr.mxu0 0.0
  %122 = vmatpush1.msra.mxu0 0.0
  %123 = vmatprep.subr.mxu0 0.0
  %124 = vmatpush1.msra.mxu0 0.0
  %125 = vmatprep.subr.mxu0 0.0
  %126 = vmatpush1.msra.mxu0 0.0
  %127 = vmatprep.subr.mxu0 0.0
  %128 = vmatpush1.msra.mxu0 0.0
  %129 = vmatprep.subr.mxu0 0.0
  %130 = vmatpush1.msra.mxu0 0.0
  %131 = vmatprep.subr.mxu0 0.0
  %132 = vmatpush1.msra.mxu0 0.0
  %133 = vmatprep.subr.mxu0 0.0
  %134 = vmatpush1.msra.mxu0 0.0
  %135 = vmatprep.subr.mxu0 0.0
  %136 = vmatpush1.msra.mxu0 0.0
  %137 = vmatprep.subr.mxu0 0.0
  %138 = vmatpush1.msra.mxu0 0.0
  %139 = vmatprep.subr.mxu0 0.0
  %140 = vmatpush1.msra.mxu0 0.0
  %141 = vmatprep.subr.mxu0 0.0
  %142 = vmatpush1.msra.mxu0 0.0
  %143 = vmatprep.subr.mxu0 0.0
  %144 = vmatpush1.msra.mxu0 0.0
  %145 = vmatprep.subr.mxu0 0.0
  %146 = vmatpush1.msra.mxu0 0.0
  %147 = vmatprep.subr.mxu0 0.0
  %148 = vmatpush1.msra.mxu0 0.0
  %149 = vmatprep.subr.mxu0 0.0
  %150 = vmatpush1.msra.mxu0 0.0
  %151 = vmatprep.subr.mxu0 0.0
  %152 = vmatpush1.msra.mxu0 0.0
  %153 = vmatprep.subr.mxu0 0.0
  %154 = vmatpush1.msra.mxu0 0.0
  %155 = vmatprep.subr.mxu0 0.0
  %156 = vmatpush1.msra.mxu0 0.0
  %157 = vmatprep.subr.mxu0 0.0
  %158 = vmatpush1.msra.mxu0 0.0
  %159 = vmatprep.subr.mxu0 0.0
  %160 = vmatpush1.msra.mxu0 0.0
  %161 = vmatprep.mubr.f32.mxu0 0.0
  %162 = vmatmul.mubr.f32.gmra.mrb[0].mxu0 %v74
  %v163 = vpop.f32.mrb[0].mxu0
  %v164 = vadd.f32 %v55, %v163
  %v165 = vpop.f32.mrb[0].mxu0
  %v166 = vadd.f32 %v59, %v165
  %167 = vmatprep.mubr.f32.mxu0 0.0
  %168 = vmatmul.mubr.f32.gmra.mrb[0].mxu0 %v77
  %v169 = vpop.f32.mrb[0].mxu0
  %v170 = vadd.f32 %v55, %v169
  %v171 = vpop.f32.mrb[0].mxu0
  %v172 = vadd.f32 %v59, %v171
  %173 = vmatprep.mubr.f32.mxu0 0.0
  %174 = vmatmul.mubr.f32.gmra.mrb[0].mxu0 %v80
  %v175 = vpop.f32.mrb[0].mxu0
  %v176 = vadd.f32 %v55, %v175
  %v177 = vpop.f32.mrb[0].mxu0
  %v178 = vadd.f32 %v59, %v177
  %179 = vmatprep.mubr.f32.mxu0 0.0
  %180 = vmatmul.mubr.f32.gmra.mrb[0].mxu0 %v83
  %v181 = vpop.f32.mrb[0].mxu0
  %v182 = vadd.f32 %v55, %v181
  %v183 = vpop.f32.mrb[0].mxu0
  %v184 = vadd.f32 %v59, %v183
  %185 = vmatprep.mubr.f32.mxu0 0.0
  %186 = vmatmul.mubr.f32.gmra.mrb[0].mxu0 %v86
  %v187 = vpop.f32.mrb[0].mxu0
  %v188 = vadd.f32 %v55, %v187
  %v189 = vpop.f32.mrb[0].mxu0
  %v190 = vadd.f32 %v59, %v189
  %191 = vmatprep.mubr.f32.mxu0 0.0
  %192 = vmatmul.mubr.f32.gmra.mrb[0].mxu0 %v89
  %v193 = vpop.f32.mrb[0].mxu0
  %v194 = vadd.f32 %v55, %v193
  %v195 = vpop.f32.mrb[0].mxu0
  %v196 = vadd.f32 %v59, %v195
  %197 = vmatprep.mubr.f32.mxu0 0.0
  %198 = vmatmul.mubr.f32.gmra.mrb[0].mxu0 %v92
  %v199 = vpop.f32.mrb[0].mxu0
  %v200 = vadd.f32 %v55, %v199
  %v201 = vpop.f32.mrb[0].mxu0
  %v202 = vadd.f32 %v59, %v201
  %203 = vmatprep.mubr.f32.mxu0 0.0
  %204 = vmatmul.mubr.f32.gmra.mrb[0].mxu0 %v95
  %v205 = vpop.f32.mrb[0].mxu0
  %v206 = vadd.f32 %v55, %v205
  %v207 = vpop.f32.mrb[0].mxu0
  %v208 = vadd.f32 %v59, %v207
  %209 = vdwg.mxu0
  %210 = vmatprep.subr.mxu0 %v37
  %211 = vmatpush1.msra.mxu0 %v36
  %212 = vmatprep.subr.mxu0 %v41
  %213 = vmatpush1.msra.mxu0 %v40
  %214 = vmatprep.subr.mxu0 %v45
  %215 = vmatpush1.msra.mxu0 %v44
  %216 = vmatprep.subr.mxu0 %v49
  %217 = vmatpush1.msra.mxu0 %v48
  %218 = vmatprep.subr.mxu0 0.0
  %219 = vmatpush1.msra.mxu0 0.0
  %220 = vmatprep.subr.mxu0 0.0
  %221 = vmatpush1.msra.mxu0 0.0
  %222 = vmatprep.subr.mxu0 0.0
  %223 = vmatpush1.msra.mxu0 0.0
  %224 = vmatprep.subr.mxu0 0.0
  %225 = vmatpush1.msra.mxu0 0.0
  %226 = vmatprep.subr.mxu0 0.0
  %227 = vmatpush1.msra.mxu0 0.0
  %228 = vmatprep.subr.mxu0 0.0
  %229 = vmatpush1.msra.mxu0 0.0
  %230 = vmatprep.subr.mxu0 0.0
  %231 = vmatpush1.msra.mxu0 0.0
  %232 = vmatprep.subr.mxu0 0.0
  %233 = vmatpush1.msra.mxu0 0.0
  %234 = vmatprep.subr.mxu0 0.0
  %235 = vmatpush1.msra.mxu0 0.0
  %236 = vmatprep.subr.mxu0 0.0
  %237 = vmatpush1.msra.mxu0 0.0
  %238 = vmatprep.subr.mxu0 0.0
  %239 = vmatpush1.msra.mxu0 0.0
  %240 = vmatprep.subr.mxu0 0.0
  %241 = vmatpush1.msra.mxu0 0.0
  %242 = vmatprep.subr.mxu0 0.0
  %243 = vmatpush1.msra.mxu0 0.0
  %244 = vmatprep.subr.mxu0 0.0
  %245 = vmatpush1.msra.mxu0 0.0
  %246 = vmatprep.subr.mxu0 0.0
  %247 = vmatpush1.msra.mxu0 0.0
  %248 = vmatprep.subr.mxu0 0.0
  %249 = vmatpush1.msra.mxu0 0.0
  %250 = vmatprep.subr.mxu0 0.0
  %251 = vmatpush1.msra.mxu0 0.0
  %252 = vmatprep.subr.mxu0 0.0
  %253 = vmatpush1.msra.mxu0 0.0
  %254 = vmatprep.subr.mxu0 0.0
  %255 = vmatpush1.msra.mxu0 0.0
  %256 = vmatprep.subr.mxu0 0.0
  %257 = vmatpush1.msra.mxu0 0.0
  %258 = vmatprep.subr.mxu0 0.0
  %259 = vmatpush1.msra.mxu0 0.0
  %260 = vmatprep.subr.mxu0 0.0
  %261 = vmatpush1.msra.mxu0 0.0
  %262 = vmatprep.subr.mxu0 0.0
  %263 = vmatpush1.msra.mxu0 0.0
  %264 = vmatprep.subr.mxu0 0.0
  %265 = vmatpush1.msra.mxu0 0.0
  %266 = vmatprep.subr.mxu0 0.0
  %267 = vmatpush1.msra.mxu0 0.0
  %268 = vmatprep.subr.mxu0 0.0
  %269 = vmatpush1.msra.mxu0 0.0
  %270 = vmatprep.subr.mxu0 0.0
  %271 = vmatpush1.msra.mxu0 0.0
  %272 = vmatprep.subr.mxu0 0.0
  %273 = vmatpush1.msra.mxu0 0.0
  %274 = vmatprep.mubr.f32.mxu0 0.0
  %275 = vmatmul.mubr.f32.gmra.mrb[0].mxu0 %v74
  %v276 = vpop.f32.mrb[0].mxu0
  %v277 = vadd.f32 %v63, %v276
  %v278 = vpop.f32.mrb[0].mxu0
  %v279 = vadd.f32 %v67, %v278
  %280 = vmatprep.mubr.f32.mxu0 0.0
  %281 = vmatmul.mubr.f32.gmra.mrb[0].mxu0 %v77
  %v282 = vpop.f32.mrb[0].mxu0
  %v283 = vadd.f32 %v63, %v282
  %v284 = vpop.f32.mrb[0].mxu0
  %v285 = vadd.f32 %v67, %v284
  %286 = vmatprep.mubr.f32.mxu0 0.0
  %287 = vmatmul.mubr.f32.gmra.mrb[0].mxu0 %v80
  %v288 = vpop.f32.mrb[0].mxu0
  %v289 = vadd.f32 %v63, %v288
  %v290 = vpop.f32.mrb[0].mxu0
  %v291 = vadd.f32 %v67, %v290
  %292 = vmatprep.mubr.f32.mxu0 0.0
  %293 = vmatmul.mubr.f32.gmra.mrb[0].mxu0 %v83
  %v294 = vpop.f32.mrb[0].mxu0
  %v295 = vadd.f32 %v63, %v294
  %v296 = vpop.f32.mrb[0].mxu0
  %v297 = vadd.f32 %v67, %v296
  %298 = vmatprep.mubr.f32.mxu0 0.0
  %299 = vmatmul.mubr.f32.gmra.mrb[0].mxu0 %v86
  %v300 = vpop.f32.mrb[0].mxu0
  %v301 = vadd.f32 %v63, %v300
  %v302 = vpop.f32.mrb[0].mxu0
  %v303 = vadd.f32 %v67, %v302
  %304 = vmatprep.mubr.f32.mxu0 0.0
  %305 = vmatmul.mubr.f32.gmra.mrb[0].mxu0 %v89
  %v306 = vpop.f32.mrb[0].mxu0
  %v307 = vadd.f32 %v63, %v306
  %v308 = vpop.f32.mrb[0].mxu0
  %v309 = vadd.f32 %v67, %v308
  %310 = vmatprep.mubr.f32.mxu0 0.0
  %311 = vmatmul.mubr.f32.gmra.mrb[0].mxu0 %v92
  %v312 = vpop.f32.mrb[0].mxu0
  %v313 = vadd.f32 %v63, %v312
  %v314 = vpop.f32.mrb[0].mxu0
  %v315 = vadd.f32 %v67, %v314
  %316 = vmatprep.mubr.f32.mxu0 0.0
  %317 = vmatmul.mubr.f32.gmra.mrb[0].mxu0 %v95
  %v318 = vpop.f32.mrb[0].mxu0
  %v319 = vadd.f32 %v63, %v318
  %v320 = vpop.f32.mrb[0].mxu0
  %v321 = vadd.f32 %v67, %v320
  %322 = vdwg.mxu0
  %323 = vst [vmem:[#allocation2] sm:$0xff] %v164
  %324 = vst [vmem:[#allocation2 + $0x8] sm:$0xff] %v166
  %325 = vst [vmem:[#allocation2 + $0x10] sm:$0xff] %v277
  %326 = vst [vmem:[#allocation2 + $0x18] sm:$0xff] %v279
  %327 = vst [vmem:[#allocation2 + $0x20] sm:$0xff] %v170
  %328 = vst [vmem:[#allocation2 + $0x28] sm:$0xff] %v172
  %329 = vst [vmem:[#allocation2 + $0x30] sm:$0xff] %v283
  %330 = vst [vmem:[#allocation2 + $0x38] sm:$0xff] %v285
  %331 = vst [vmem:[#allocation2 + $0x40] sm:$0xff] %v176
  %332 = vst [vmem:[#allocation2 + $0x48] sm:$0xff] %v178
  %333 = vst [vmem:[#allocation2 + $0x50] sm:$0xff] %v289
  %334 = vst [vmem:[#allocation2 + $0x58] sm:$0xff] %v291
  %335 = vst [vmem:[#allocation2 + $0x60] sm:$0xff] %v182
  %336 = vst [vmem:[#allocation2 + $0x68] sm:$0xff] %v184
  %337 = vst [vmem:[#allocation2 + $0x70] sm:$0xff] %v295
  %338 = vst [vmem:[#allocation2 + $0x78] sm:$0xff] %v297
  %339 = vst [vmem:[#allocation2 + $0x80] sm:$0xff] %v188
  %340 = vst [vmem:[#allocation2 + $0x88] sm:$0xff] %v190
  %341 = vst [vmem:[#allocation2 + $0x90] sm:$0xff] %v301
  %342 = vst [vmem:[#allocation2 + $0x98] sm:$0xff] %v303
  %343 = vst [vmem:[#allocation2 + $0xa0] sm:$0xff] %v194
  %344 = vst [vmem:[#allocation2 + $0xa8] sm:$0xff] %v196
  %345 = vst [vmem:[#allocation2 + $0xb0] sm:$0xff] %v307
  %346 = vst [vmem:[#allocation2 + $0xb8] sm:$0xff] %v309
  %347 = vst [vmem:[#allocation2 + $0xc0] sm:$0xff] %v200
  %348 = vst [vmem:[#allocation2 + $0xc8] sm:$0xff] %v202
  %349 = vst [vmem:[#allocation2 + $0xd0] sm:$0xff] %v313
  %350 = vst [vmem:[#allocation2 + $0xd8] sm:$0xff] %v315
  %351 = vst [vmem:[#allocation2 + $0xe0] sm:$0xff] %v206
  %352 = vst [vmem:[#allocation2 + $0xe8] sm:$0xff] %v208
  %353 = vst [vmem:[#allocation2 + $0xf0] sm:$0xff] %v319
  %354 = vst [vmem:[#allocation2 + $0xf8] sm:$0xff] %v321
  %v355 = vld [vmem:[%s2] sm:$0xff]
  %v356 = vld [vmem:[%s2 + $0x8] sm:$0xff]
  %v357 = vld [vmem:[%s2 + $0x10] sm:$0xff]
  %v358 = vld [vmem:[%s2 + $0x18] sm:$0xff]
  %v359 = vld [vmem:[%s2 + $0x20] sm:$0xff]
  %v360 = vld [vmem:[%s2 + $0x28] sm:$0xff]
  %v361 = vld [vmem:[%s2 + $0x30] sm:$0xff]
  %v362 = vld [vmem:[%s2 + $0x38] sm:$0xff]
  %v363 = vld [vmem:[%s2 + $0x40] sm:$0xff]
  %v364 = vld [vmem:[%s2 + $0x48] sm:$0xff]
  %v365 = vld [vmem:[%s2 + $0x50] sm:$0xff]
  %v366 = vld [vmem:[%s2 + $0x58] sm:$0xff]
  %v367 = vld [vmem:[%s2 + $0x60] sm:$0xff]
  %v368 = vld [vmem:[%s2 + $0x68] sm:$0xff]
  %v369 = vld [vmem:[%s2 + $0x70] sm:$0xff]
  %v370 = vld [vmem:[%s2 + $0x78] sm:$0xff]
  %v371 = vld [vmem:[%s2 + $0x80] sm:$0xff]
  %v372 = vld [vmem:[%s2 + $0x88] sm:$0xff]
  %v373 = vld [vmem:[%s2 + $0x90] sm:$0xff]
  %v374 = vld [vmem:[%s2 + $0x98] sm:$0xff]
  %v375 = vld [vmem:[%s2 + $0xa0] sm:$0xff]
  %v376 = vld [vmem:[%s2 + $0xa8] sm:$0xff]
  %v377 = vld [vmem:[%s2 + $0xb0] sm:$0xff]
  %v378 = vld [vmem:[%s2 + $0xb8] sm:$0xff]
  %v379 = vld [vmem:[%s2 + $0xc0] sm:$0xff]
  %v380 = vld [vmem:[%s2 + $0xc8] sm:$0xff]
  %v381 = vld [vmem:[%s2 + $0xd0] sm:$0xff]
  %v382 = vld [vmem:[%s2 + $0xd8] sm:$0xff]
  %v383 = vld [vmem:[%s2 + $0xe0] sm:$0xff]
  %v384 = vld [vmem:[%s2 + $0xe8] sm:$0xff]
  %v385 = vld [vmem:[%s2 + $0xf0] sm:$0xff]
  %v386 = vld [vmem:[%s2 + $0xf8] sm:$0xff]
  %v387 = vld [vmem:[%s2 + $0x100] sm:$0xff]
  %v388 = vld [vmem:[%s2 + $0x108] sm:$0xff]
  %v389 = vld [vmem:[%s2 + $0x110] sm:$0xff]
  %v390 = vld [vmem:[%s2 + $0x118] sm:$0xff]
  %v391 = vld [vmem:[%s2 + $0x120] sm:$0xff]
  %v392 = vld [vmem:[%s2 + $0x128] sm:$0xff]
  %v393 = vld [vmem:[%s2 + $0x130] sm:$0xff]
  %v394 = vld [vmem:[%s2 + $0x138] sm:$0xff]
  %v395 = vld [vmem:[%s2 + $0x140] sm:$0xff]
  %v396 = vld [vmem:[%s2 + $0x148] sm:$0xff]
  %v397 = vld [vmem:[%s2 + $0x150] sm:$0xff]
  %v398 = vld [vmem:[%s2 + $0x158] sm:$0xff]
  %v399 = vld [vmem:[%s2 + $0x160] sm:$0xff]
  %v400 = vld [vmem:[%s2 + $0x168] sm:$0xff]
  %v401 = vld [vmem:[%s2 + $0x170] sm:$0xff]
  %v402 = vld [vmem:[%s2 + $0x178] sm:$0xff]
  %v403 = vld [vmem:[%s2 + $0x180] sm:$0xff]
  %v404 = vld [vmem:[%s2 + $0x188] sm:$0xff]
  %v405 = vld [vmem:[%s2 + $0x190] sm:$0xff]
  %v406 = vld [vmem:[%s2 + $0x198] sm:$0xff]
  %v407 = vld [vmem:[%s2 + $0x1a0] sm:$0xff]
  %v408 = vld [vmem:[%s2 + $0x1a8] sm:$0xff]
  %v409 = vld [vmem:[%s2 + $0x1b0] sm:$0xff]
  %v410 = vld [vmem:[%s2 + $0x1b8] sm:$0xff]
  %v411 = vld [vmem:[%s2 + $0x1c0] sm:$0xff]
  %v412 = vld [vmem:[%s2 + $0x1c8] sm:$0xff]
  %v413 = vld [vmem:[%s2 + $0x1d0] sm:$0xff]
  %v414 = vld [vmem:[%s2 + $0x1d8] sm:$0xff]
  %v415 = vld [vmem:[%s2 + $0x1e0] sm:$0xff]
  %v416 = vld [vmem:[%s2 + $0x1e8] sm:$0xff]
  %v417 = vld [vmem:[%s2 + $0x1f0] sm:$0xff]
  %v418 = vld [vmem:[%s2 + $0x1f8] sm:$0xff]
  %v419 = vld [vmem:[%s5] sm:$0xff]
  %v420 = vld [vmem:[%s6] sm:$0xff]
  %s421 = smul.u32 0, 4
  %s422 = smul.addr %s421, 8
  %s423 = scalar_lea.vmem [#allocation2], %s422
  %v424 = vld [vmem:[%s423] sm:$0xff]
  %v425 = vld [vmem:[%s423 + $0x8] sm:$0xff]
  %v426 = vld [vmem:[%s423 + $0x10] sm:$0xff]
  %v427 = vld [vmem:[%s423 + $0x18] sm:$0xff]
  %428 = vmatprep.subr.mxu0 %v356
  %429 = vmatpush1.msra.mxu0 %v355
  %430 = vmatprep.subr.mxu0 %v360
  %431 = vmatpush1.msra.mxu0 %v359
  %432 = vmatprep.subr.mxu0 %v364
  %433 = vmatpush1.msra.mxu0 %v363
  %434 = vmatprep.subr.mxu0 %v368
  %435 = vmatpush1.msra.mxu0 %v367
  %436 = vmatprep.subr.mxu0 %v372
  %437 = vmatpush1.msra.mxu0 %v371
  %438 = vmatprep.subr.mxu0 %v376
  %439 = vmatpush1.msra.mxu0 %v375
  %440 = vmatprep.subr.mxu0 %v380
  %441 = vmatpush1.msra.mxu0 %v379
  %442 = vmatprep.subr.mxu0 %v384
  %443 = vmatpush1.msra.mxu0 %v383
  %444 = vmatprep.subr.mxu0 %v388
  %445 = vmatpush1.msra.mxu0 %v387
  %446 = vmatprep.subr.mxu0 %v392
  %447 = vmatpush1.msra.mxu0 %v391
  %448 = vmatprep.subr.mxu0 %v396
  %449 = vmatpush1.msra.mxu0 %v395
  %450 = vmatprep.subr.mxu0 %v400
  %451 = vmatpush1.msra.mxu0 %v399
  %452 = vmatprep.subr.mxu0 %v404
  %453 = vmatpush1.msra.mxu0 %v403
  %454 = vmatprep.subr.mxu0 %v408
  %455 = vmatpush1.msra.mxu0 %v407
  %456 = vmatprep.subr.mxu0 %v412
  %457 = vmatpush1.msra.mxu0 %v411
  %458 = vmatprep.subr.mxu0 %v416
  %459 = vmatpush1.msra.mxu0 %v415
  %460 = vmatprep.subr.mxu0 0.0
  %461 = vmatpush1.msra.mxu0 0.0
  %462 = vmatprep.subr.mxu0 0.0
  %463 = vmatpush1.msra.mxu0 0.0
  %464 = vmatprep.subr.mxu0 0.0
  %465 = vmatpush1.msra.mxu0 0.0
  %466 = vmatprep.subr.mxu0 0.0
  %467 = vmatpush1.msra.mxu0 0.0
  %468 = vmatprep.subr.mxu0 0.0
  %469 = vmatpush1.msra.mxu0 0.0
  %470 = vmatprep.subr.mxu0 0.0
  %471 = vmatpush1.msra.mxu0 0.0
  %472 = vmatprep.subr.mxu0 0.0
  %473 = vmatpush1.msra.mxu0 0.0
  %474 = vmatprep.subr.mxu0 0.0
  %475 = vmatpush1.msra.mxu0 0.0
  %476 = vmatprep.subr.mxu0 0.0
  %477 = vmatpush1.msra.mxu0 0.0
  %478 = vmatprep.subr.mxu0 0.0
  %479 = vmatpush1.msra.mxu0 0.0
  %480 = vmatprep.subr.mxu0 0.0
  %481 = vmatpush1.msra.mxu0 0.0
  %482 = vmatprep.subr.mxu0 0.0
  %483 = vmatpush1.msra.mxu0 0.0
  %484 = vmatprep.subr.mxu0 0.0
  %485 = vmatpush1.msra.mxu0 0.0
  %486 = vmatprep.subr.mxu0 0.0
  %487 = vmatpush1.msra.mxu0 0.0
  %488 = vmatprep.subr.mxu0 0.0
  %489 = vmatpush1.msra.mxu0 0.0
  %490 = vmatprep.subr.mxu0 0.0
  %491 = vmatpush1.msra.mxu0 0.0
  %492 = vmatprep.mubr.f32.mxu0 0.0
  %493 = vmatmul.mubr.f32.gmra.mrb[0].mxu0 %v419
  %v494 = vpop.f32.mrb[0].mxu0
  %v495 = vadd.f32 0.0, %v494
  %v496 = vpop.f32.mrb[0].mxu0
  %v497 = vadd.f32 0.0, %v496
  %498 = vdwg.mxu0
  %499 = vmatprep.subr.mxu0 %v358
  %500 = vmatpush1.msra.mxu0 %v357
  %501 = vmatprep.subr.mxu0 %v362
  %502 = vmatpush1.msra.mxu0 %v361
  %503 = vmatprep.subr.mxu0 %v366
  %504 = vmatpush1.msra.mxu0 %v365
  %505 = vmatprep.subr.mxu0 %v370
  %506 = vmatpush1.msra.mxu0 %v369
  %507 = vmatprep.subr.mxu0 %v374
  %508 = vmatpush1.msra.mxu0 %v373
  %509 = vmatprep.subr.mxu0 %v378
  %510 = vmatpush1.msra.mxu0 %v377
  %511 = vmatprep.subr.mxu0 %v382
  %512 = vmatpush1.msra.mxu0 %v381
  %513 = vmatprep.subr.mxu0 %v386
  %514 = vmatpush1.msra.mxu0 %v385
  %515 = vmatprep.subr.mxu0 %v390
  %516 = vmatpush1.msra.mxu0 %v389
  %517 = vmatprep.subr.mxu0 %v394
  %518 = vmatpush1.msra.mxu0 %v393
  %519 = vmatprep.subr.mxu0 %v398
  %520 = vmatpush1.msra.mxu0 %v397
  %521 = vmatprep.subr.mxu0 %v402
  %522 = vmatpush1.msra.mxu0 %v401
  %523 = vmatprep.subr.mxu0 %v406
  %524 = vmatpush1.msra.mxu0 %v405
  %525 = vmatprep.subr.mxu0 %v410
  %526 = vmatpush1.msra.mxu0 %v409
  %527 = vmatprep.subr.mxu0 %v414
  %528 = vmatpush1.msra.mxu0 %v413
  %529 = vmatprep.subr.mxu0 %v418
  %530 = vmatpush1.msra.mxu0 %v417
  %531 = vmatprep.subr.mxu0 0.0
  %532 = vmatpush1.msra.mxu0 0.0
  %533 = vmatprep.subr.mxu0 0.0
  %534 = vmatpush1.msra.mxu0 0.0
  %535 = vmatprep.subr.mxu0 0.0
  %536 = vmatpush1.msra.mxu0 0.0
  %537 = vmatprep.subr.mxu0 0.0
  %538 = vmatpush1.msra.mxu0 0.0
  %539 = vmatprep.subr.mxu0 0.0
  %540 = vmatpush1.msra.mxu0 0.0
  %541 = vmatprep.subr.mxu0 0.0
  %542 = vmatpush1.msra.mxu0 0.0
  %543 = vmatprep.subr.mxu0 0.0
  %544 = vmatpush1.msra.mxu0 0.0
  %545 = vmatprep.subr.mxu0 0.0
  %546 = vmatpush1.msra.mxu0 0.0
  %547 = vmatprep.subr.mxu0 0.0
  %548 = vmatpush1.msra.mxu0 0.0
  %549 = vmatprep.subr.mxu0 0.0
  %550 = vmatpush1.msra.mxu0 0.0
  %551 = vmatprep.subr.mxu0 0.0
  %552 = vmatpush1.msra.mxu0 0.0
  %553 = vmatprep.subr.mxu0 0.0
  %554 = vmatpush1.msra.mxu0 0.0
  %555 = vmatprep.subr.mxu0 0.0
  %556 = vmatpush1.msra.mxu0 0.0
  %557 = vmatprep.subr.mxu0 0.0
  %558 = vmatpush1.msra.mxu0 0.0
  %559 = vmatprep.subr.mxu0 0.0
  %560 = vmatpush1.msra.mxu0 0.0
  %561 = vmatprep.subr.mxu0 0.0
  %562 = vmatpush1.msra.mxu0 0.0
  %563 = vmatprep.mubr.f32.mxu0 0.0
  %564 = vmatmul.mubr.f32.gmra.mrb[0].mxu0 %v419
  %v565 = vpop.f32.mrb[0].mxu0
  %v566 = vadd.f32 0.0, %v565
  %v567 = vpop.f32.mrb[0].mxu0
  %v568 = vadd.f32 0.0, %v567
  %569 = vdwg.mxu0
  %v570 = vadd.f32 %v424, %v495
  %v571 = vadd.f32 %v425, %v497
  %v572 = vadd.f32 %v426, %v566
  %v573 = vadd.f32 %v427, %v568
  %v574 = vxor.u32 %v570, 2147483648
  %v575 = vmul.f32 %v574, 1.442695
  %v576 = vpow.pop %v575
  %v577 = vadd.f32 %v576, 1.0
  %v578 = vrcp.pop %v577
  %v579 = vmul.f32 1.0, %v578
  %v580 = vxor.u32 %v571, 2147483648
  %v581 = vmul.f32 %v580, 1.442695
  %v582 = vpow.pop %v581
  %v583 = vadd.f32 %v582, 1.0
  %v584 = vrcp.pop %v583
  %v585 = vmul.f32 1.0, %v584
  %v586 = vtanh.pop %v572
  %v587 = vxor.u32 %v573, 2147483648
  %v588 = vmul.f32 %v587, 1.442695
  %v589 = vpow.pop %v588
  %v590 = vadd.f32 %v589, 1.0
  %v591 = vrcp.pop %v590
  %v592 = vmul.f32 1.0, %v591
  %v593 = vmul.f32 %v585, %v420
  %v594 = vmul.f32 %v579, %v586
  %v595 = vadd.f32 %v593, %v594
  %v596 = vtanh.pop %v595
  %v597 = vmul.f32 %v592, %v596
  %v599 = vcombine.high %v597, %v597
  %v601 = vunpack.c.l.s4 1966171168
  %v602 = vunpack.c.0.s8 %v601
  %v603 = vlaneseq
  %v604 = vshrl.u32 %v603, 7
  %v605 = vsub.s32 %v602, %v604
  %v606 = vrot.slane %v597, %v605
  %v608 = vunpack.c.l.s4 1966171168
  %v609 = vunpack.c.0.s8 %v608
  %v610 = vlaneseq
  %v611 = vshrl.u32 %v610, 7
  %v612 = vsub.s32 %v609, %v611
  %v613 = vrot.slane %v599, %v612
  %v614 = vcombine.high %v606, %v606
  %v615 = vcombine.high %v613, %v613
  %v617 = vunpack.c.l.s4 1966171168
  %v618 = vunpack.c.0.s8 %v617
  %v619 = vlaneseq
  %v620 = vshrl.u32 %v619, 7
  %v621 = vsub.s32 %v618, %v620
  %v622 = vrot.slane %v606, %v621
  %v624 = vunpack.c.l.s4 1966171168
  %v625 = vunpack.c.0.s8 %v624
  %v626 = vlaneseq
  %v627 = vshrl.u32 %v626, 7
  %v628 = vsub.s32 %v625, %v627
  %v629 = vrot.slane %v613, %v628
  %v631 = vunpack.c.l.s4 1966171168
  %v632 = vunpack.c.0.s8 %v631
  %v633 = vlaneseq
  %v634 = vshrl.u32 %v633, 7
  %v635 = vsub.s32 %v632, %v634
  %v636 = vrot.slane %v614, %v635
  %v638 = vunpack.c.l.s4 1966171168
  %v639 = vunpack.c.0.s8 %v638
  %v640 = vlaneseq
  %v641 = vshrl.u32 %v640, 7
  %v642 = vsub.s32 %v639, %v641
  %v643 = vrot.slane %v615, %v642
  %v644 = vcombine.high %v622, %v622
  %v645 = vcombine.high %v629, %v629
  %v646 = vcombine.high %v636, %v636
  %v647 = vcombine.high %v643, %v643
  %656 = vst [vmem:[%s4] sm:$0x1] %v622
  %657 = vst [vmem:[%s4 + $0x8] sm:$0x1] %v636
  %658 = vst [vmem:[%s4 + $0x10] sm:$0x1] %v644
  %659 = vst [vmem:[%s4 + $0x18] sm:$0x1] %v646
  %660 = vst [vmem:[%s4 + $0x20] sm:$0x1] %v629
  %661 = vst [vmem:[%s4 + $0x28] sm:$0x1] %v643
  %662 = vst [vmem:[%s4 + $0x30] sm:$0x1] %v645
  %663 = vst [vmem:[%s4 + $0x38] sm:$0x1] %v647
  %s664 = smul.u32 1, 4
  %s665 = smul.addr %s664, 8
  %s666 = scalar_lea.vmem [#allocation2], %s665
  %v667 = vld [vmem:[%s666] sm:$0xff]
  %v668 = vld [vmem:[%s666 + $0x8] sm:$0xff]
  %v669 = vld [vmem:[%s666 + $0x10] sm:$0xff]
  %v670 = vld [vmem:[%s666 + $0x18] sm:$0xff]
  %671 = vmatprep.subr.mxu0 %v356
  %672 = vmatpush1.msra.mxu0 %v355
  %673 = vmatprep.subr.mxu0 %v360
  %674 = vmatpush1.msra.mxu0 %v359
  %675 = vmatprep.subr.mxu0 %v364
  %676 = vmatpush1.msra.mxu0 %v363
  %677 = vmatprep.subr.mxu0 %v368
  %678 = vmatpush1.msra.mxu0 %v367
  %679 = vmatprep.subr.mxu0 %v372
  %680 = vmatpush1.msra.mxu0 %v371
  %681 = vmatprep.subr.mxu0 %v376
  %682 = vmatpush1.msra.mxu0 %v375
  %683 = vmatprep.subr.mxu0 %v380
  %684 = vmatpush1.msra.mxu0 %v379
  %685 = vmatprep.subr.mxu0 %v384
  %686 = vmatpush1.msra.mxu0 %v383
  %687 = vmatprep.subr.mxu0 %v388
  %688 = vmatpush1.msra.mxu0 %v387
  %689 = vmatprep.subr.mxu0 %v392
  %690 = vmatpush1.msra.mxu0 %v391
  %691 = vmatprep.subr.mxu0 %v396
  %692 = vmatpush1.msra.mxu0 %v395
  %693 = vmatprep.subr.mxu0 %v400
  %694 = vmatpush1.msra.mxu0 %v399
  %695 = vmatprep.subr.mxu0 %v404
  %696 = vmatpush1.msra.mxu0 %v403
  %697 = vmatprep.subr.mxu0 %v408
  %698 = vmatpush1.msra.mxu0 %v407
  %699 = vmatprep.subr.mxu0 %v412
  %700 = vmatpush1.msra.mxu0 %v411
  %701 = vmatprep.subr.mxu0 %v416
  %702 = vmatpush1.msra.mxu0 %v415
  %703 = vmatprep.subr.mxu0 0.0
  %704 = vmatpush1.msra.mxu0 0.0
  %705 = vmatprep.subr.mxu0 0.0
  %706 = vmatpush1.msra.mxu0 0.0
  %707 = vmatprep.subr.mxu0 0.0
  %708 = vmatpush1.msra.mxu0 0.0
  %709 = vmatprep.subr.mxu0 0.0
  %710 = vmatpush1.msra.mxu0 0.0
  %711 = vmatprep.subr.mxu0 0.0
  %712 = vmatpush1.msra.mxu0 0.0
  %713 = vmatprep.subr.mxu0 0.0
  %714 = vmatpush1.msra.mxu0 0.0
  %715 = vmatprep.subr.mxu0 0.0
  %716 = vmatpush1.msra.mxu0 0.0
  %717 = vmatprep.subr.mxu0 0.0
  %718 = vmatpush1.msra.mxu0 0.0
  %719 = vmatprep.subr.mxu0 0.0
  %720 = vmatpush1.msra.mxu0 0.0
  %721 = vmatprep.subr.mxu0 0.0
  %722 = vmatpush1.msra.mxu0 0.0
  %723 = vmatprep.subr.mxu0 0.0
  %724 = vmatpush1.msra.mxu0 0.0
  %725 = vmatprep.subr.mxu0 0.0
  %726 = vmatpush1.msra.mxu0 0.0
  %727 = vmatprep.subr.mxu0 0.0
  %728 = vmatpush1.msra.mxu0 0.0
  %729 = vmatprep.subr.mxu0 0.0
  %730 = vmatpush1.msra.mxu0 0.0
  %731 = vmatprep.subr.mxu0 0.0
  %732 = vmatpush1.msra.mxu0 0.0
  %733 = vmatprep.subr.mxu0 0.0
  %734 = vmatpush1.msra.mxu0 0.0
  %735 = vmatprep.mubr.f32.mxu0 0.0
  %736 = vmatmul.mubr.f32.gmra.mrb[0].mxu0 %v597
  %v737 = vpop.f32.mrb[0].mxu0
  %v738 = vadd.f32 0.0, %v737
  %v739 = vpop.f32.mrb[0].mxu0
  %v740 = vadd.f32 0.0, %v739
  %741 = vdwg.mxu0
  %742 = vmatprep.subr.mxu0 %v358
  %743 = vmatpush1.msra.mxu0 %v357
  %744 = vmatprep.subr.mxu0 %v362
  %745 = vmatpush1.msra.mxu0 %v361
  %746 = vmatprep.subr.mxu0 %v366
  %747 = vmatpush1.msra.mxu0 %v365
  %748 = vmatprep.subr.mxu0 %v370
  %749 = vmatpush1.msra.mxu0 %v369
  %750 = vmatprep.subr.mxu0 %v374
  %751 = vmatpush1.msra.mxu0 %v373
  %752 = vmatprep.subr.mxu0 %v378
  %753 = vmatpush1.msra.mxu0 %v377
  %754 = vmatprep.subr.mxu0 %v382
  %755 = vmatpush1.msra.mxu0 %v381
  %756 = vmatprep.subr.mxu0 %v386
  %757 = vmatpush1.msra.mxu0 %v385
  %758 = vmatprep.subr.mxu0 %v390
  %759 = vmatpush1.msra.mxu0 %v389
  %760 = vmatprep.subr.mxu0 %v394
  %761 = vmatpush1.msra.mxu0 %v393
  %762 = vmatprep.subr.mxu0 %v398
  %763 = vmatpush1.msra.mxu0 %v397
  %764 = vmatprep.subr.mxu0 %v402
  %765 = vmatpush1.msra.mxu0 %v401
  %766 = vmatprep.subr.mxu0 %v406
  %767 = vmatpush1.msra.mxu0 %v405
  %768 = vmatprep.subr.mxu0 %v410
  %769 = vmatpush1.msra.mxu0 %v409
  %770 = vmatprep.subr.mxu0 %v414
  %771 = vmatpush1.msra.mxu0 %v413
  %772 = vmatprep.subr.mxu0 %v418
  %773 = vmatpush1.msra.mxu0 %v417
  %774 = vmatprep.subr.mxu0 0.0
  %775 = vmatpush1.msra.mxu0 0.0
  %776 = vmatprep.subr.mxu0 0.0
  %777 = vmatpush1.msra.mxu0 0.0
  %778 = vmatprep.subr.mxu0 0.0
  %779 = vmatpush1.msra.mxu0 0.0
  %780 = vmatprep.subr.mxu0 0.0
  %781 = vmatpush1.msra.mxu0 0.0
  %782 = vmatprep.subr.mxu0 0.0
  %783 = vmatpush1.msra.mxu0 0.0
  %784 = vmatprep.subr.mxu0 0.0
  %785 = vmatpush1.msra.mxu0 0.0
  %786 = vmatprep.subr.mxu0 0.0
  %787 = vmatpush1.msra.mxu0 0.0
  %788 = vmatprep.subr.mxu0 0.0
  %789 = vmatpush1.msra.mxu0 0.0
  %790 = vmatprep.subr.mxu0 0.0
  %791 = vmatpush1.msra.mxu0 0.0
  %792 = vmatprep.subr.mxu0 0.0
  %793 = vmatpush1.msra.mxu0 0.0
  %794 = vmatprep.subr.mxu0 0.0
  %795 = vmatpush1.msra.mxu0 0.0
  %796 = vmatprep.subr.mxu0 0.0
  %797 = vmatpush1.msra.mxu0 0.0
  %798 = vmatprep.subr.mxu0 0.0
  %799 = vmatpush1.msra.mxu0 0.0
  %800 = vmatprep.subr.mxu0 0.0
  %801 = vmatpush1.msra.mxu0 0.0
  %802 = vmatprep.subr.mxu0 0.0
  %803 = vmatpush1.msra.mxu0 0.0
  %804 = vmatprep.subr.mxu0 0.0
  %805 = vmatpush1.msra.mxu0 0.0
  %806 = vmatprep.mubr.f32.mxu0 0.0
  %807 = vmatmul.mubr.f32.gmra.mrb[0].mxu0 %v597
  %v808 = vpop.f32.mrb[0].mxu0
  %v809 = vadd.f32 0.0, %v808
  %v810 = vpop.f32.mrb[0].mxu0
  %v811 = vadd.f32 0.0, %v810
  %812 = vdwg.mxu0
  %v813 = vadd.f32 %v667, %v738
  %v814 = vadd.f32 %v668, %v740
  %v815 = vadd.f32 %v669, %v809
  %v816 = vadd.f32 %v670, %v811
  %v817 = vxor.u32 %v813, 2147483648
  %v818 = vmul.f32 %v817, 1.442695
  %v819 = vpow.pop %v818
  %v820 = vadd.f32 %v819, 1.0
  %v821 = vrcp.pop %v820
  %v822 = vmul.f32 1.0, %v821
  %v823 = vxor.u32 %v814, 2147483648
  %v824 = vmul.f32 %v823, 1.442695
  %v825 = vpow.pop %v824
  %v826 = vadd.f32 %v825, 1.0
  %v827 = vrcp.pop %v826
  %v828 = vmul.f32 1.0, %v827
  %v829 = vtanh.pop %v815
  %v830 = vxor.u32 %v816, 2147483648
  %v831 = vmul.f32 %v830, 1.442695
  %v832 = vpow.pop %v831
  %v833 = vadd.f32 %v832, 1.0
  %v834 = vrcp.pop %v833
  %v835 = vmul.f32 1.0, %v834
  %v836 = vmul.f32 %v828, %v595
  %v837 = vmul.f32 %v822, %v829
  %v838 = vadd.f32 %v836, %v837
  %v839 = vtanh.pop %v838
  %v840 = vmul.f32 %v835, %v839
  %v842 = vcombine.high %v840, %v840
  %v844 = vunpack.c.l.s4 1966171168
  %v845 = vunpack.c.0.s8 %v844
  %v846 = vlaneseq
  %v847 = vshrl.u32 %v846, 7
  %v848 = vsub.s32 %v845, %v847
  %v849 = vrot.slane %v840, %v848
  %v851 = vunpack.c.l.s4 1966171168
  %v852 = vunpack.c.0.s8 %v851
  %v853 = vlaneseq
  %v854 = vshrl.u32 %v853, 7
  %v855 = vsub.s32 %v852, %v854
  %v856 = vrot.slane %v842, %v855
  %v857 = vcombine.high %v849, %v849
  %v858 = vcombine.high %v856, %v856
  %v860 = vunpack.c.l.s4 1966171168
  %v861 = vunpack.c.0.s8 %v860
  %v862 = vlaneseq
  %v863 = vshrl.u32 %v862, 7
  %v864 = vsub.s32 %v861, %v863
  %v865 = vrot.slane %v849, %v864
  %v867 = vunpack.c.l.s4 1966171168
  %v868 = vunpack.c.0.s8 %v867
  %v869 = vlaneseq
  %v870 = vshrl.u32 %v869, 7
  %v871 = vsub.s32 %v868, %v870
  %v872 = vrot.slane %v856, %v871
  %v874 = vunpack.c.l.s4 1966171168
  %v875 = vunpack.c.0.s8 %v874
  %v876 = vlaneseq
  %v877 = vshrl.u32 %v876, 7
  %v878 = vsub.s32 %v875, %v877
  %v879 = vrot.slane %v857, %v878
  %v881 = vunpack.c.l.s4 1966171168
  %v882 = vunpack.c.0.s8 %v881
  %v883 = vlaneseq
  %v884 = vshrl.u32 %v883, 7
  %v885 = vsub.s32 %v882, %v884
  %v886 = vrot.slane %v858, %v885
  %v887 = vcombine.high %v865, %v865
  %v888 = vcombine.high %v872, %v872
  %v889 = vcombine.high %v879, %v879
  %v890 = vcombine.high %v886, %v886
  %899 = vst [vmem:[%s4 + $0x1] sm:$0x1] %v865
  %900 = vst [vmem:[%s4 + $0x9] sm:$0x1] %v879
  %901 = vst [vmem:[%s4 + $0x11] sm:$0x1] %v887
  %902 = vst [vmem:[%s4 + $0x19] sm:$0x1] %v889
  %903 = vst [vmem:[%s4 + $0x21] sm:$0x1] %v872
  %904 = vst [vmem:[%s4 + $0x29] sm:$0x1] %v886
  %905 = vst [vmem:[%s4 + $0x31] sm:$0x1] %v888
  %906 = vst [vmem:[%s4 + $0x39] sm:$0x1] %v890
  %s907 = smul.u32 2, 4
  %s908 = smul.addr %s907, 8
  %s909 = scalar_lea.vmem [#allocation2], %s908
  %v910 = vld [vmem:[%s909] sm:$0xff]
  %v911 = vld [vmem:[%s909 + $0x8] sm:$0xff]
  %v912 = vld [vmem:[%s909 + $0x10] sm:$0xff]
  %v913 = vld [vmem:[%s909 + $0x18] sm:$0xff]
  %914 = vmatprep.subr.mxu0 %v356
  %915 = vmatpush1.msra.mxu0 %v355
  %916 = vmatprep.subr.mxu0 %v360
  %917 = vmatpush1.msra.mxu0 %v359
  %918 = vmatprep.subr.mxu0 %v364
  %919 = vmatpush1.msra.mxu0 %v363
  %920 = vmatprep.subr.mxu0 %v368
  %921 = vmatpush1.msra.mxu0 %v367
  %922 = vmatprep.subr.mxu0 %v372
  %923 = vmatpush1.msra.mxu0 %v371
  %924 = vmatprep.subr.mxu0 %v376
  %925 = vmatpush1.msra.mxu0 %v375
  %926 = vmatprep.subr.mxu0 %v380
  %927 = vmatpush1.msra.mxu0 %v379
  %928 = vmatprep.subr.mxu0 %v384
  %929 = vmatpush1.msra.mxu0 %v383
  %930 = vmatprep.subr.mxu0 %v388
  %931 = vmatpush1.msra.mxu0 %v387
  %932 = vmatprep.subr.mxu0 %v392
  %933 = vmatpush1.msra.mxu0 %v391
  %934 = vmatprep.subr.mxu0 %v396
  %935 = vmatpush1.msra.mxu0 %v395
  %936 = vmatprep.subr.mxu0 %v400
  %937 = vmatpush1.msra.mxu0 %v399
  %938 = vmatprep.subr.mxu0 %v404
  %939 = vmatpush1.msra.mxu0 %v403
  %940 = vmatprep.subr.mxu0 %v408
  %941 = vmatpush1.msra.mxu0 %v407
  %942 = vmatprep.subr.mxu0 %v412
  %943 = vmatpush1.msra.mxu0 %v411
  %944 = vmatprep.subr.mxu0 %v416
  %945 = vmatpush1.msra.mxu0 %v415
  %946 = vmatprep.subr.mxu0 0.0
  %947 = vmatpush1.msra.mxu0 0.0
  %948 = vmatprep.subr.mxu0 0.0
  %949 = vmatpush1.msra.mxu0 0.0
  %950 = vmatprep.subr.mxu0 0.0
  %951 = vmatpush1.msra.mxu0 0.0
  %952 = vmatprep.subr.mxu0 0.0
  %953 = vmatpush1.msra.mxu0 0.0
  %954 = vmatprep.subr.mxu0 0.0
  %955 = vmatpush1.msra.mxu0 0.0
  %956 = vmatprep.subr.mxu0 0.0
  %957 = vmatpush1.msra.mxu0 0.0
  %958 = vmatprep.subr.mxu0 0.0
  %959 = vmatpush1.msra.mxu0 0.0
  %960 = vmatprep.subr.mxu0 0.0
  %961 = vmatpush1.msra.mxu0 0.0
  %962 = vmatprep.subr.mxu0 0.0
  %963 = vmatpush1.msra.mxu0 0.0
  %964 = vmatprep.subr.mxu0 0.0
  %965 = vmatpush1.msra.mxu0 0.0
  %966 = vmatprep.subr.mxu0 0.0
  %967 = vmatpush1.msra.mxu0 0.0
  %968 = vmatprep.subr.mxu0 0.0
  %969 = vmatpush1.msra.mxu0 0.0
  %970 = vmatprep.subr.mxu0 0.0
  %971 = vmatpush1.msra.mxu0 0.0
  %972 = vmatprep.subr.mxu0 0.0
  %973 = vmatpush1.msra.mxu0 0.0
  %974 = vmatprep.subr.mxu0 0.0
  %975 = vmatpush1.msra.mxu0 0.0
  %976 = vmatprep.subr.mxu0 0.0
  %977 = vmatpush1.msra.mxu0 0.0
  %978 = vmatprep.mubr.f32.mxu0 0.0
  %979 = vmatmul.mubr.f32.gmra.mrb[0].mxu0 %v840
  %v980 = vpop.f32.mrb[0].mxu0
  %v981 = vadd.f32 0.0, %v980
  %v982 = vpop.f32.mrb[0].mxu0
  %v983 = vadd.f32 0.0, %v982
  %984 = vdwg.mxu0
  %985 = vmatprep.subr.mxu0 %v358
  %986 = vmatpush1.msra.mxu0 %v357
  %987 = vmatprep.subr.mxu0 %v362
  %988 = vmatpush1.msra.mxu0 %v361
  %989 = vmatprep.subr.mxu0 %v366
  %990 = vmatpush1.msra.mxu0 %v365
  %991 = vmatprep.subr.mxu0 %v370
  %992 = vmatpush1.msra.mxu0 %v369
  %993 = vmatprep.subr.mxu0 %v374
  %994 = vmatpush1.msra.mxu0 %v373
  %995 = vmatprep.subr.mxu0 %v378
  %996 = vmatpush1.msra.mxu0 %v377
  %997 = vmatprep.subr.mxu0 %v382
  %998 = vmatpush1.msra.mxu0 %v381
  %999 = vmatprep.subr.mxu0 %v386
  %1000 = vmatpush1.msra.mxu0 %v385
  %1001 = vmatprep.subr.mxu0 %v390
  %1002 = vmatpush1.msra.mxu0 %v389
  %1003 = vmatprep.subr.mxu0 %v394
  %1004 = vmatpush1.msra.mxu0 %v393
  %1005 = vmatprep.subr.mxu0 %v398
  %1006 = vmatpush1.msra.mxu0 %v397
  %1007 = vmatprep.subr.mxu0 %v402
  %1008 = vmatpush1.msra.mxu0 %v401
  %1009 = vmatprep.subr.mxu0 %v406
  %1010 = vmatpush1.msra.mxu0 %v405
  %1011 = vmatprep.subr.mxu0 %v410
  %1012 = vmatpush1.msra.mxu0 %v409
  %1013 = vmatprep.subr.mxu0 %v414
  %1014 = vmatpush1.msra.mxu0 %v413
  %1015 = vmatprep.subr.mxu0 %v418
  %1016 = vmatpush1.msra.mxu0 %v417
  %1017 = vmatprep.subr.mxu0 0.0
  %1018 = vmatpush1.msra.mxu0 0.0
  %1019 = vmatprep.subr.mxu0 0.0
  %1020 = vmatpush1.msra.mxu0 0.0
  %1021 = vmatprep.subr.mxu0 0.0
  %1022 = vmatpush1.msra.mxu0 0.0
  %1023 = vmatprep.subr.mxu0 0.0
  %1024 = vmatpush1.msra.mxu0 0.0
  %1025 = vmatprep.subr.mxu0 0.0
  %1026 = vmatpush1.msra.mxu0 0.0
  %1027 = vmatprep.subr.mxu0 0.0
  %1028 = vmatpush1.msra.mxu0 0.0
  %1029 = vmatprep.subr.mxu0 0.0
  %1030 = vmatpush1.msra.mxu0 0.0
  %1031 = vmatprep.subr.mxu0 0.0
  %1032 = vmatpush1.msra.mxu0 0.0
  %1033 = vmatprep.subr.mxu0 0.0
  %1034 = vmatpush1.msra.mxu0 0.0
  %1035 = vmatprep.subr.mxu0 0.0
  %1036 = vmatpush1.msra.mxu0 0.0
  %1037 = vmatprep.subr.mxu0 0.0
  %1038 = vmatpush1.msra.mxu0 0.0
  %1039 = vmatprep.subr.mxu0 0.0
  %1040 = vmatpush1.msra.mxu0 0.0
  %1041 = vmatprep.subr.mxu0 0.0
  %1042 = vmatpush1.msra.mxu0 0.0
  %1043 = vmatprep.subr.mxu0 0.0
  %1044 = vmatpush1.msra.mxu0 0.0
  %1045 = vmatprep.subr.mxu0 0.0
  %1046 = vmatpush1.msra.mxu0 0.0
  %1047 = vmatprep.subr.mxu0 0.0
  %1048 = vmatpush1.msra.mxu0 0.0
  %1049 = vmatprep.mubr.f32.mxu0 0.0
  %1050 = vmatmul.mubr.f32.gmra.mrb[0].mxu0 %v840
  %v1051 = vpop.f32.mrb[0].mxu0
  %v1052 = vadd.f32 0.0, %v1051
  %v1053 = vpop.f32.mrb[0].mxu0
  %v1054 = vadd.f32 0.0, %v1053
  %1055 = vdwg.mxu0
  %v1056 = vadd.f32 %v910, %v981
  %v1057 = vadd.f32 %v911, %v983
  %v1058 = vadd.f32 %v912, %v1052
  %v1059 = vadd.f32 %v913, %v1054
  %v1060 = vxor.u32 %v1056, 2147483648
  %v1061 = vmul.f32 %v1060, 1.442695
  %v1062 = vpow.pop %v1061
  %v1063 = vadd.f32 %v1062, 1.0
  %v1064 = vrcp.pop %v1063
  %v1065 = vmul.f32 1.0, %v1064
  %v1066 = vxor.u32 %v1057, 2147483648
  %v1067 = vmul.f32 %v1066, 1.442695
  %v1068 = vpow.pop %v1067
  %v1069 = vadd.f32 %v1068, 1.0
  %v1070 = vrcp.pop %v1069
  %v1071 = vmul.f32 1.0, %v1070
  %v1072 = vtanh.pop %v1058
  %v1073 = vxor.u32 %v1059, 2147483648
  %v1074 = vmul.f32 %v1073, 1.442695
  %v1075 = vpow.pop %v1074
  %v1076 = vadd.f32 %v1075, 1.0
  %v1077 = vrcp.pop %v1076
  %v1078 = vmul.f32 1.0, %v1077
  %v1079 = vmul.f32 %v1071, %v838
  %v1080 = vmul.f32 %v1065, %v1072
  %v1081 = vadd.f32 %v1079, %v1080
  %v1082 = vtanh.pop %v1081
  %v1083 = vmul.f32 %v1078, %v1082
  %v1085 = vcombine.high %v1083, %v1083
  %v1087 = vunpack.c.l.s4 1966171168
  %v1088 = vunpack.c.0.s8 %v1087
  %v1089 = vlaneseq
  %v1090 = vshrl.u32 %v1089, 7
  %v1091 = vsub.s32 %v1088, %v1090
  %v1092 = vrot.slane %v1083, %v1091
  %v1094 = vunpack.c.l.s4 1966171168
  %v1095 = vunpack.c.0.s8 %v1094
  %v1096 = vlaneseq
  %v1097 = vshrl.u32 %v1096, 7
  %v1098 = vsub.s32 %v1095, %v1097
  %v1099 = vrot.slane %v1085, %v1098
  %v1100 = vcombine.high %v1092, %v1092
  %v1101 = vcombine.high %v1099, %v1099
  %v1103 = vunpack.c.l.s4 1966171168
  %v1104 = vunpack.c.0.s8 %v1103
  %v1105 = vlaneseq
  %v1106 = vshrl.u32 %v1105, 7
  %v1107 = vsub.s32 %v1104, %v1106
  %v1108 = vrot.slane %v1092, %v1107
  %v1110 = vunpack.c.l.s4 1966171168
  %v1111 = vunpack.c.0.s8 %v1110
  %v1112 = vlaneseq
  %v1113 = vshrl.u32 %v1112, 7
  %v1114 = vsub.s32 %v1111, %v1113
  %v1115 = vrot.slane %v1099, %v1114
  %v1117 = vunpack.c.l.s4 1966171168
  %v1118 = vunpack.c.0.s8 %v1117
  %v1119 = vlaneseq
  %v1120 = vshrl.u32 %v1119, 7
  %v1121 = vsub.s32 %v1118, %v1120
  %v1122 = vrot.slane %v1100, %v1121
  %v1124 = vunpack.c.l.s4 1966171168
  %v1125 = vunpack.c.0.s8 %v1124
  %v1126 = vlaneseq
  %v1127 = vshrl.u32 %v1126, 7
  %v1128 = vsub.s32 %v1125, %v1127
  %v1129 = vrot.slane %v1101, %v1128
  %v1130 = vcombine.high %v1108, %v1108
  %v1131 = vcombine.high %v1115, %v1115
  %v1132 = vcombine.high %v1122, %v1122
  %v1133 = vcombine.high %v1129, %v1129
  %1142 = vst [vmem:[%s4 + $0x2] sm:$0x1] %v1108
  %1143 = vst [vmem:[%s4 + $0xa] sm:$0x1] %v1122
  %1144 = vst [vmem:[%s4 + $0x12] sm:$0x1] %v1130
  %1145 = vst [vmem:[%s4 + $0x1a] sm:$0x1] %v1132
  %1146 = vst [vmem:[%s4 + $0x22] sm:$0x1] %v1115
  %1147 = vst [vmem:[%s4 + $0x2a] sm:$0x1] %v1129
  %1148 = vst [vmem:[%s4 + $0x32] sm:$0x1] %v1131
  %1149 = vst [vmem:[%s4 + $0x3a] sm:$0x1] %v1133
  %s1150 = smul.u32 3, 4
  %s1151 = smul.addr %s1150, 8
  %s1152 = scalar_lea.vmem [#allocation2], %s1151
  %v1153 = vld [vmem:[%s1152] sm:$0xff]
  %v1154 = vld [vmem:[%s1152 + $0x8] sm:$0xff]
  %v1155 = vld [vmem:[%s1152 + $0x10] sm:$0xff]
  %v1156 = vld [vmem:[%s1152 + $0x18] sm:$0xff]
  %1157 = vmatprep.subr.mxu0 %v356
  %1158 = vmatpush1.msra.mxu0 %v355
  %1159 = vmatprep.subr.mxu0 %v360
  %1160 = vmatpush1.msra.mxu0 %v359
  %1161 = vmatprep.subr.mxu0 %v364
  %1162 = vmatpush1.msra.mxu0 %v363
  %1163 = vmatprep.subr.mxu0 %v368
  %1164 = vmatpush1.msra.mxu0 %v367
  %1165 = vmatprep.subr.mxu0 %v372
  %1166 = vmatpush1.msra.mxu0 %v371
  %1167 = vmatprep.subr.mxu0 %v376
  %1168 = vmatpush1.msra.mxu0 %v375
  %1169 = vmatprep.subr.mxu0 %v380
  %1170 = vmatpush1.msra.mxu0 %v379
  %1171 = vmatprep.subr.mxu0 %v384
  %1172 = vmatpush1.msra.mxu0 %v383
  %1173 = vmatprep.subr.mxu0 %v388
  %1174 = vmatpush1.msra.mxu0 %v387
  %1175 = vmatprep.subr.mxu0 %v392
  %1176 = vmatpush1.msra.mxu0 %v391
  %1177 = vmatprep.subr.mxu0 %v396
  %1178 = vmatpush1.msra.mxu0 %v395
  %1179 = vmatprep.subr.mxu0 %v400
  %1180 = vmatpush1.msra.mxu0 %v399
  %1181 = vmatprep.subr.mxu0 %v404
  %1182 = vmatpush1.msra.mxu0 %v403
  %1183 = vmatprep.subr.mxu0 %v408
  %1184 = vmatpush1.msra.mxu0 %v407
  %1185 = vmatprep.subr.mxu0 %v412
  %1186 = vmatpush1.msra.mxu0 %v411
  %1187 = vmatprep.subr.mxu0 %v416
  %1188 = vmatpush1.msra.mxu0 %v415
  %1189 = vmatprep.subr.mxu0 0.0
  %1190 = vmatpush1.msra.mxu0 0.0
  %1191 = vmatprep.subr.mxu0 0.0
  %1192 = vmatpush1.msra.mxu0 0.0
  %1193 = vmatprep.subr.mxu0 0.0
  %1194 = vmatpush1.msra.mxu0 0.0
  %1195 = vmatprep.subr.mxu0 0.0
  %1196 = vmatpush1.msra.mxu0 0.0
  %1197 = vmatprep.subr.mxu0 0.0
  %1198 = vmatpush1.msra.mxu0 0.0
  %1199 = vmatprep.subr.mxu0 0.0
  %1200 = vmatpush1.msra.mxu0 0.0
  %1201 = vmatprep.subr.mxu0 0.0
  %1202 = vmatpush1.msra.mxu0 0.0
  %1203 = vmatprep.subr.mxu0 0.0
  %1204 = vmatpush1.msra.mxu0 0.0
  %1205 = vmatprep.subr.mxu0 0.0
  %1206 = vmatpush1.msra.mxu0 0.0
  %1207 = vmatprep.subr.mxu0 0.0
  %1208 = vmatpush1.msra.mxu0 0.0
  %1209 = vmatprep.subr.mxu0 0.0
  %1210 = vmatpush1.msra.mxu0 0.0
  %1211 = vmatprep.subr.mxu0 0.0
  %1212 = vmatpush1.msra.mxu0 0.0
  %1213 = vmatprep.subr.mxu0 0.0
  %1214 = vmatpush1.msra.mxu0 0.0
  %1215 = vmatprep.subr.mxu0 0.0
  %1216 = vmatpush1.msra.mxu0 0.0
  %1217 = vmatprep.subr.mxu0 0.0
  %1218 = vmatpush1.msra.mxu0 0.0
  %1219 = vmatprep.subr.mxu0 0.0
  %1220 = vmatpush1.msra.mxu0 0.0
  %1221 = vmatprep.mubr.f32.mxu0 0.0
  %1222 = vmatmul.mubr.f32.gmra.mrb[0].mxu0 %v1083
  %v1223 = vpop.f32.mrb[0].mxu0
  %v1224 = vadd.f32 0.0, %v1223
  %v1225 = vpop.f32.mrb[0].mxu0
  %v1226 = vadd.f32 0.0, %v1225
  %1227 = vdwg.mxu0
  %1228 = vmatprep.subr.mxu0 %v358
  %1229 = vmatpush1.msra.mxu0 %v357
  %1230 = vmatprep.subr.mxu0 %v362
  %1231 = vmatpush1.msra.mxu0 %v361
  %1232 = vmatprep.subr.mxu0 %v366
  %1233 = vmatpush1.msra.mxu0 %v365
  %1234 = vmatprep.subr.mxu0 %v370
  %1235 = vmatpush1.msra.mxu0 %v369
  %1236 = vmatprep.subr.mxu0 %v374
  %1237 = vmatpush1.msra.mxu0 %v373
  %1238 = vmatprep.subr.mxu0 %v378
  %1239 = vmatpush1.msra.mxu0 %v377
  %1240 = vmatprep.subr.mxu0 %v382
  %1241 = vmatpush1.msra.mxu0 %v381
  %1242 = vmatprep.subr.mxu0 %v386
  %1243 = vmatpush1.msra.mxu0 %v385
  %1244 = vmatprep.subr.mxu0 %v390
  %1245 = vmatpush1.msra.mxu0 %v389
  %1246 = vmatprep.subr.mxu0 %v394
  %1247 = vmatpush1.msra.mxu0 %v393
  %1248 = vmatprep.subr.mxu0 %v398
  %1249 = vmatpush1.msra.mxu0 %v397
  %1250 = vmatprep.subr.mxu0 %v402
  %1251 = vmatpush1.msra.mxu0 %v401
  %1252 = vmatprep.subr.mxu0 %v406
  %1253 = vmatpush1.msra.mxu0 %v405
  %1254 = vmatprep.subr.mxu0 %v410
  %1255 = vmatpush1.msra.mxu0 %v409
  %1256 = vmatprep.subr.mxu0 %v414
  %1257 = vmatpush1.msra.mxu0 %v413
  %1258 = vmatprep.subr.mxu0 %v418
  %1259 = vmatpush1.msra.mxu0 %v417
  %1260 = vmatprep.subr.mxu0 0.0
  %1261 = vmatpush1.msra.mxu0 0.0
  %1262 = vmatprep.subr.mxu0 0.0
  %1263 = vmatpush1.msra.mxu0 0.0
  %1264 = vmatprep.subr.mxu0 0.0
  %1265 = vmatpush1.msra.mxu0 0.0
  %1266 = vmatprep.subr.mxu0 0.0
  %1267 = vmatpush1.msra.mxu0 0.0
  %1268 = vmatprep.subr.mxu0 0.0
  %1269 = vmatpush1.msra.mxu0 0.0
  %1270 = vmatprep.subr.mxu0 0.0
  %1271 = vmatpush1.msra.mxu0 0.0
  %1272 = vmatprep.subr.mxu0 0.0
  %1273 = vmatpush1.msra.mxu0 0.0
  %1274 = vmatprep.subr.mxu0 0.0
  %1275 = vmatpush1.msra.mxu0 0.0
  %1276 = vmatprep.subr.mxu0 0.0
  %1277 = vmatpush1.msra.mxu0 0.0
  %1278 = vmatprep.subr.mxu0 0.0
  %1279 = vmatpush1.msra.mxu0 0.0
  %1280 = vmatprep.subr.mxu0 0.0
  %1281 = vmatpush1.msra.mxu0 0.0
  %1282 = vmatprep.subr.mxu0 0.0
  %1283 = vmatpush1.msra.mxu0 0.0
  %1284 = vmatprep.subr.mxu0 0.0
  %1285 = vmatpush1.msra.mxu0 0.0
  %1286 = vmatprep.subr.mxu0 0.0
  %1287 = vmatpush1.msra.mxu0 0.0
  %1288 = vmatprep.subr.mxu0 0.0
  %1289 = vmatpush1.msra.mxu0 0.0
  %1290 = vmatprep.subr.mxu0 0.0
  %1291 = vmatpush1.msra.mxu0 0.0
  %1292 = vmatprep.mubr.f32.mxu0 0.0
  %1293 = vmatmul.mubr.f32.gmra.mrb[0].mxu0 %v1083
  %v1294 = vpop.f32.mrb[0].mxu0
  %v1295 = vadd.f32 0.0, %v1294
  %v1296 = vpop.f32.mrb[0].mxu0
  %v1297 = vadd.f32 0.0, %v1296
  %1298 = vdwg.mxu0
  %v1299 = vadd.f32 %v1153, %v1224
  %v1300 = vadd.f32 %v1154, %v1226
  %v1301 = vadd.f32 %v1155, %v1295
  %v1302 = vadd.f32 %v1156, %v1297
  %v1303 = vxor.u32 %v1299, 2147483648
  %v1304 = vmul.f32 %v1303, 1.442695
  %v1305 = vpow.pop %v1304
  %v1306 = vadd.f32 %v1305, 1.0
  %v1307 = vrcp.pop %v1306
  %v1308 = vmul.f32 1.0, %v1307
  %v1309 = vxor.u32 %v1300, 2147483648
  %v1310 = vmul.f32 %v1309, 1.442695
  %v1311 = vpow.pop %v1310
  %v1312 = vadd.f32 %v1311, 1.0
  %v1313 = vrcp.pop %v1312
  %v1314 = vmul.f32 1.0, %v1313
  %v1315 = vtanh.pop %v1301
  %v1316 = vxor.u32 %v1302, 2147483648
  %v1317 = vmul.f32 %v1316, 1.442695
  %v1318 = vpow.pop %v1317
  %v1319 = vadd.f32 %v1318, 1.0
  %v1320 = vrcp.pop %v1319
  %v1321 = vmul.f32 1.0, %v1320
  %v1322 = vmul.f32 %v1314, %v1081
  %v1323 = vmul.f32 %v1308, %v1315
  %v1324 = vadd.f32 %v1322, %v1323
  %v1325 = vtanh.pop %v1324
  %v1326 = vmul.f32 %v1321, %v1325
  %v1328 = vcombine.high %v1326, %v1326
  %v1330 = vunpack.c.l.s4 1966171168
  %v1331 = vunpack.c.0.s8 %v1330
  %v1332 = vlaneseq
  %v1333 = vshrl.u32 %v1332, 7
  %v1334 = vsub.s32 %v1331, %v1333
  %v1335 = vrot.slane %v1326, %v1334
  %v1337 = vunpack.c.l.s4 1966171168
  %v1338 = vunpack.c.0.s8 %v1337
  %v1339 = vlaneseq
  %v1340 = vshrl.u32 %v1339, 7
  %v1341 = vsub.s32 %v1338, %v1340
  %v1342 = vrot.slane %v1328, %v1341
  %v1343 = vcombine.high %v1335, %v1335
  %v1344 = vcombine.high %v1342, %v1342
  %v1346 = vunpack.c.l.s4 1966171168
  %v1347 = vunpack.c.0.s8 %v1346
  %v1348 = vlaneseq
  %v1349 = vshrl.u32 %v1348, 7
  %v1350 = vsub.s32 %v1347, %v1349
  %v1351 = vrot.slane %v1335, %v1350
  %v1353 = vunpack.c.l.s4 1966171168
  %v1354 = vunpack.c.0.s8 %v1353
  %v1355 = vlaneseq
  %v1356 = vshrl.u32 %v1355, 7
  %v1357 = vsub.s32 %v1354, %v1356
  %v1358 = vrot.slane %v1342, %v1357
  %v1360 = vunpack.c.l.s4 1966171168
  %v1361 = vunpack.c.0.s8 %v1360
  %v1362 = vlaneseq
  %v1363 = vshrl.u32 %v1362, 7
  %v1364 = vsub.s32 %v1361, %v1363
  %v1365 = vrot.slane %v1343, %v1364
  %v1367 = vunpack.c.l.s4 1966171168
  %v1368 = vunpack.c.0.s8 %v1367
  %v1369 = vlaneseq
  %v1370 = vshrl.u32 %v1369, 7
  %v1371 = vsub.s32 %v1368, %v1370
  %v1372 = vrot.slane %v1344, %v1371
  %v1373 = vcombine.high %v1351, %v1351
  %v1374 = vcombine.high %v1358, %v1358
  %v1375 = vcombine.high %v1365, %v1365
  %v1376 = vcombine.high %v1372, %v1372
  %1385 = vst [vmem:[%s4 + $0x3] sm:$0x1] %v1351
  %1386 = vst [vmem:[%s4 + $0xb] sm:$0x1] %v1365
  %1387 = vst [vmem:[%s4 + $0x13] sm:$0x1] %v1373
  %1388 = vst [vmem:[%s4 + $0x1b] sm:$0x1] %v1375
  %1389 = vst [vmem:[%s4 + $0x23] sm:$0x1] %v1358
  %1390 = vst [vmem:[%s4 + $0x2b] sm:$0x1] %v1372
  %1391 = vst [vmem:[%s4 + $0x33] sm:$0x1] %v1374
  %1392 = vst [vmem:[%s4 + $0x3b] sm:$0x1] %v1376
  %s1393 = smul.u32 4, 4
  %s1394 = smul.addr %s1393, 8
  %s1395 = scalar_lea.vmem [#allocation2], %s1394
  %v1396 = vld [vmem:[%s1395] sm:$0xff]
  %v1397 = vld [vmem:[%s1395 + $0x8] sm:$0xff]
  %v1398 = vld [vmem:[%s1395 + $0x10] sm:$0xff]
  %v1399 = vld [vmem:[%s1395 + $0x18] sm:$0xff]
  %1400 = vmatprep.subr.mxu0 %v356
  %1401 = vmatpush1.msra.mxu0 %v355
  %1402 = vmatprep.subr.mxu0 %v360
  %1403 = vmatpush1.msra.mxu0 %v359
  %1404 = vmatprep.subr.mxu0 %v364
  %1405 = vmatpush1.msra.mxu0 %v363
  %1406 = vmatprep.subr.mxu0 %v368
  %1407 = vmatpush1.msra.mxu0 %v367
  %1408 = vmatprep.subr.mxu0 %v372
  %1409 = vmatpush1.msra.mxu0 %v371
  %1410 = vmatprep.subr.mxu0 %v376
  %1411 = vmatpush1.msra.mxu0 %v375
  %1412 = vmatprep.subr.mxu0 %v380
  %1413 = vmatpush1.msra.mxu0 %v379
  %1414 = vmatprep.subr.mxu0 %v384
  %1415 = vmatpush1.msra.mxu0 %v383
  %1416 = vmatprep.subr.mxu0 %v388
  %1417 = vmatpush1.msra.mxu0 %v387
  %1418 = vmatprep.subr.mxu0 %v392
  %1419 = vmatpush1.msra.mxu0 %v391
  %1420 = vmatprep.subr.mxu0 %v396
  %1421 = vmatpush1.msra.mxu0 %v395
  %1422 = vmatprep.subr.mxu0 %v400
  %1423 = vmatpush1.msra.mxu0 %v399
  %1424 = vmatprep.subr.mxu0 %v404
  %1425 = vmatpush1.msra.mxu0 %v403
  %1426 = vmatprep.subr.mxu0 %v408
  %1427 = vmatpush1.msra.mxu0 %v407
  %1428 = vmatprep.subr.mxu0 %v412
  %1429 = vmatpush1.msra.mxu0 %v411
  %1430 = vmatprep.subr.mxu0 %v416
  %1431 = vmatpush1.msra.mxu0 %v415
  %1432 = vmatprep.subr.mxu0 0.0
  %1433 = vmatpush1.msra.mxu0 0.0
  %1434 = vmatprep.subr.mxu0 0.0
  %1435 = vmatpush1.msra.mxu0 0.0
  %1436 = vmatprep.subr.mxu0 0.0
  %1437 = vmatpush1.msra.mxu0 0.0
  %1438 = vmatprep.subr.mxu0 0.0
  %1439 = vmatpush1.msra.mxu0 0.0
  %1440 = vmatprep.subr.mxu0 0.0
  %1441 = vmatpush1.msra.mxu0 0.0
  %1442 = vmatprep.subr.mxu0 0.0
  %1443 = vmatpush1.msra.mxu0 0.0
  %1444 = vmatprep.subr.mxu0 0.0
  %1445 = vmatpush1.msra.mxu0 0.0
  %1446 = vmatprep.subr.mxu0 0.0
  %1447 = vmatpush1.msra.mxu0 0.0
  %1448 = vmatprep.subr.mxu0 0.0
  %1449 = vmatpush1.msra.mxu0 0.0
  %1450 = vmatprep.subr.mxu0 0.0
  %1451 = vmatpush1.msra.mxu0 0.0
  %1452 = vmatprep.subr.mxu0 0.0
  %1453 = vmatpush1.msra.mxu0 0.0
  %1454 = vmatprep.subr.mxu0 0.0
  %1455 = vmatpush1.msra.mxu0 0.0
  %1456 = vmatprep.subr.mxu0 0.0
  %1457 = vmatpush1.msra.mxu0 0.0
  %1458 = vmatprep.subr.mxu0 0.0
  %1459 = vmatpush1.msra.mxu0 0.0
  %1460 = vmatprep.subr.mxu0 0.0
  %1461 = vmatpush1.msra.mxu0 0.0
  %1462 = vmatprep.subr.mxu0 0.0
  %1463 = vmatpush1.msra.mxu0 0.0
  %1464 = vmatprep.mubr.f32.mxu0 0.0
  %1465 = vmatmul.mubr.f32.gmra.mrb[0].mxu0 %v1326
  %v1466 = vpop.f32.mrb[0].mxu0
  %v1467 = vadd.f32 0.0, %v1466
  %v1468 = vpop.f32.mrb[0].mxu0
  %v1469 = vadd.f32 0.0, %v1468
  %1470 = vdwg.mxu0
  %1471 = vmatprep.subr.mxu0 %v358
  %1472 = vmatpush1.msra.mxu0 %v357
  %1473 = vmatprep.subr.mxu0 %v362
  %1474 = vmatpush1.msra.mxu0 %v361
  %1475 = vmatprep.subr.mxu0 %v366
  %1476 = vmatpush1.msra.mxu0 %v365
  %1477 = vmatprep.subr.mxu0 %v370
  %1478 = vmatpush1.msra.mxu0 %v369
  %1479 = vmatprep.subr.mxu0 %v374
  %1480 = vmatpush1.msra.mxu0 %v373
  %1481 = vmatprep.subr.mxu0 %v378
  %1482 = vmatpush1.msra.mxu0 %v377
  %1483 = vmatprep.subr.mxu0 %v382
  %1484 = vmatpush1.msra.mxu0 %v381
  %1485 = vmatprep.subr.mxu0 %v386
  %1486 = vmatpush1.msra.mxu0 %v385
  %1487 = vmatprep.subr.mxu0 %v390
  %1488 = vmatpush1.msra.mxu0 %v389
  %1489 = vmatprep.subr.mxu0 %v394
  %1490 = vmatpush1.msra.mxu0 %v393
  %1491 = vmatprep.subr.mxu0 %v398
  %1492 = vmatpush1.msra.mxu0 %v397
  %1493 = vmatprep.subr.mxu0 %v402
  %1494 = vmatpush1.msra.mxu0 %v401
  %1495 = vmatprep.subr.mxu0 %v406
  %1496 = vmatpush1.msra.mxu0 %v405
  %1497 = vmatprep.subr.mxu0 %v410
  %1498 = vmatpush1.msra.mxu0 %v409
  %1499 = vmatprep.subr.mxu0 %v414
  %1500 = vmatpush1.msra.mxu0 %v413
  %1501 = vmatprep.subr.mxu0 %v418
  %1502 = vmatpush1.msra.mxu0 %v417
  %1503 = vmatprep.subr.mxu0 0.0
  %1504 = vmatpush1.msra.mxu0 0.0
  %1505 = vmatprep.subr.mxu0 0.0
  %1506 = vmatpush1.msra.mxu0 0.0
  %1507 = vmatprep.subr.mxu0 0.0
  %1508 = vmatpush1.msra.mxu0 0.0
  %1509 = vmatprep.subr.mxu0 0.0
  %1510 = vmatpush1.msra.mxu0 0.0
  %1511 = vmatprep.subr.mxu0 0.0
  %1512 = vmatpush1.msra.mxu0 0.0
  %1513 = vmatprep.subr.mxu0 0.0
  %1514 = vmatpush1.msra.mxu0 0.0
  %1515 = vmatprep.subr.mxu0 0.0
  %1516 = vmatpush1.msra.mxu0 0.0
  %1517 = vmatprep.subr.mxu0 0.0
  %1518 = vmatpush1.msra.mxu0 0.0
  %1519 = vmatprep.subr.mxu0 0.0
  %1520 = vmatpush1.msra.mxu0 0.0
  %1521 = vmatprep.subr.mxu0 0.0
  %1522 = vmatpush1.msra.mxu0 0.0
  %1523 = vmatprep.subr.mxu0 0.0
  %1524 = vmatpush1.msra.mxu0 0.0
  %1525 = vmatprep.subr.mxu0 0.0
  %1526 = vmatpush1.msra.mxu0 0.0
  %1527 = vmatprep.subr.mxu0 0.0
  %1528 = vmatpush1.msra.mxu0 0.0
  %1529 = vmatprep.subr.mxu0 0.0
  %1530 = vmatpush1.msra.mxu0 0.0
  %1531 = vmatprep.subr.mxu0 0.0
  %1532 = vmatpush1.msra.mxu0 0.0
  %1533 = vmatprep.subr.mxu0 0.0
  %1534 = vmatpush1.msra.mxu0 0.0
  %1535 = vmatprep.mubr.f32.mxu0 0.0
  %1536 = vmatmul.mubr.f32.gmra.mrb[0].mxu0 %v1326
  %v1537 = vpop.f32.mrb[0].mxu0
  %v1538 = vadd.f32 0.0, %v1537
  %v1539 = vpop.f32.mrb[0].mxu0
  %v1540 = vadd.f32 0.0, %v1539
  %1541 = vdwg.mxu0
  %v1542 = vadd.f32 %v1396, %v1467
  %v1543 = vadd.f32 %v1397, %v1469
  %v1544 = vadd.f32 %v1398, %v1538
  %v1545 = vadd.f32 %v1399, %v1540
  %v1546 = vxor.u32 %v1542, 2147483648
  %v1547 = vmul.f32 %v1546, 1.442695
  %v1548 = vpow.pop %v1547
  %v1549 = vadd.f32 %v1548, 1.0
  %v1550 = vrcp.pop %v1549
  %v1551 = vmul.f32 1.0, %v1550
  %v1552 = vxor.u32 %v1543, 2147483648
  %v1553 = vmul.f32 %v1552, 1.442695
  %v1554 = vpow.pop %v1553
  %v1555 = vadd.f32 %v1554, 1.0
  %v1556 = vrcp.pop %v1555
  %v1557 = vmul.f32 1.0, %v1556
  %v1558 = vtanh.pop %v1544
  %v1559 = vxor.u32 %v1545, 2147483648
  %v1560 = vmul.f32 %v1559, 1.442695
  %v1561 = vpow.pop %v1560
  %v1562 = vadd.f32 %v1561, 1.0
  %v1563 = vrcp.pop %v1562
  %v1564 = vmul.f32 1.0, %v1563
  %v1565 = vmul.f32 %v1557, %v1324
  %v1566 = vmul.f32 %v1551, %v1558
  %v1567 = vadd.f32 %v1565, %v1566
  %v1568 = vtanh.pop %v1567
  %v1569 = vmul.f32 %v1564, %v1568
  %v1571 = vcombine.high %v1569, %v1569
  %v1573 = vunpack.c.l.s4 1966171168
  %v1574 = vunpack.c.0.s8 %v1573
  %v1575 = vlaneseq
  %v1576 = vshrl.u32 %v1575, 7
  %v1577 = vsub.s32 %v1574, %v1576
  %v1578 = vrot.slane %v1569, %v1577
  %v1580 = vunpack.c.l.s4 1966171168
  %v1581 = vunpack.c.0.s8 %v1580
  %v1582 = vlaneseq
  %v1583 = vshrl.u32 %v1582, 7
  %v1584 = vsub.s32 %v1581, %v1583
  %v1585 = vrot.slane %v1571, %v1584
  %v1586 = vcombine.high %v1578, %v1578
  %v1587 = vcombine.high %v1585, %v1585
  %v1589 = vunpack.c.l.s4 1966171168
  %v1590 = vunpack.c.0.s8 %v1589
  %v1591 = vlaneseq
  %v1592 = vshrl.u32 %v1591, 7
  %v1593 = vsub.s32 %v1590, %v1592
  %v1594 = vrot.slane %v1578, %v1593
  %v1596 = vunpack.c.l.s4 1966171168
  %v1597 = vunpack.c.0.s8 %v1596
  %v1598 = vlaneseq
  %v1599 = vshrl.u32 %v1598, 7
  %v1600 = vsub.s32 %v1597, %v1599
  %v1601 = vrot.slane %v1585, %v1600
  %v1603 = vunpack.c.l.s4 1966171168
  %v1604 = vunpack.c.0.s8 %v1603
  %v1605 = vlaneseq
  %v1606 = vshrl.u32 %v1605, 7
  %v1607 = vsub.s32 %v1604, %v1606
  %v1608 = vrot.slane %v1586, %v1607
  %v1610 = vunpack.c.l.s4 1966171168
  %v1611 = vunpack.c.0.s8 %v1610
  %v1612 = vlaneseq
  %v1613 = vshrl.u32 %v1612, 7
  %v1614 = vsub.s32 %v1611, %v1613
  %v1615 = vrot.slane %v1587, %v1614
  %v1616 = vcombine.high %v1594, %v1594
  %v1617 = vcombine.high %v1601, %v1601
  %v1618 = vcombine.high %v1608, %v1608
  %v1619 = vcombine.high %v1615, %v1615
  %1628 = vst [vmem:[%s4 + $0x4] sm:$0x1] %v1594
  %1629 = vst [vmem:[%s4 + $0xc] sm:$0x1] %v1608
  %1630 = vst [vmem:[%s4 + $0x14] sm:$0x1] %v1616
  %1631 = vst [vmem:[%s4 + $0x1c] sm:$0x1] %v1618
  %1632 = vst [vmem:[%s4 + $0x24] sm:$0x1] %v1601
  %1633 = vst [vmem:[%s4 + $0x2c] sm:$0x1] %v1615
  %1634 = vst [vmem:[%s4 + $0x34] sm:$0x1] %v1617
  %1635 = vst [vmem:[%s4 + $0x3c] sm:$0x1] %v1619
  %s1636 = smul.u32 5, 4
  %s1637 = smul.addr %s1636, 8
  %s1638 = scalar_lea.vmem [#allocation2], %s1637
  %v1639 = vld [vmem:[%s1638] sm:$0xff]
  %v1640 = vld [vmem:[%s1638 + $0x8] sm:$0xff]
  %v1641 = vld [vmem:[%s1638 + $0x10] sm:$0xff]
  %v1642 = vld [vmem:[%s1638 + $0x18] sm:$0xff]
  %1643 = vmatprep.subr.mxu0 %v356
  %1644 = vmatpush1.msra.mxu0 %v355
  %1645 = vmatprep.subr.mxu0 %v360
  %1646 = vmatpush1.msra.mxu0 %v359
  %1647 = vmatprep.subr.mxu0 %v364
  %1648 = vmatpush1.msra.mxu0 %v363
  %1649 = vmatprep.subr.mxu0 %v368
  %1650 = vmatpush1.msra.mxu0 %v367
  %1651 = vmatprep.subr.mxu0 %v372
  %1652 = vmatpush1.msra.mxu0 %v371
  %1653 = vmatprep.subr.mxu0 %v376
  %1654 = vmatpush1.msra.mxu0 %v375
  %1655 = vmatprep.subr.mxu0 %v380
  %1656 = vmatpush1.msra.mxu0 %v379
  %1657 = vmatprep.subr.mxu0 %v384
  %1658 = vmatpush1.msra.mxu0 %v383
  %1659 = vmatprep.subr.mxu0 %v388
  %1660 = vmatpush1.msra.mxu0 %v387
  %1661 = vmatprep.subr.mxu0 %v392
  %1662 = vmatpush1.msra.mxu0 %v391
  %1663 = vmatprep.subr.mxu0 %v396
  %1664 = vmatpush1.msra.mxu0 %v395
  %1665 = vmatprep.subr.mxu0 %v400
  %1666 = vmatpush1.msra.mxu0 %v399
  %1667 = vmatprep.subr.mxu0 %v404
  %1668 = vmatpush1.msra.mxu0 %v403
  %1669 = vmatprep.subr.mxu0 %v408
  %1670 = vmatpush1.msra.mxu0 %v407
  %1671 = vmatprep.subr.mxu0 %v412
  %1672 = vmatpush1.msra.mxu0 %v411
  %1673 = vmatprep.subr.mxu0 %v416
  %1674 = vmatpush1.msra.mxu0 %v415
  %1675 = vmatprep.subr.mxu0 0.0
  %1676 = vmatpush1.msra.mxu0 0.0
  %1677 = vmatprep.subr.mxu0 0.0
  %1678 = vmatpush1.msra.mxu0 0.0
  %1679 = vmatprep.subr.mxu0 0.0
  %1680 = vmatpush1.msra.mxu0 0.0
  %1681 = vmatprep.subr.mxu0 0.0
  %1682 = vmatpush1.msra.mxu0 0.0
  %1683 = vmatprep.subr.mxu0 0.0
  %1684 = vmatpush1.msra.mxu0 0.0
  %1685 = vmatprep.subr.mxu0 0.0
  %1686 = vmatpush1.msra.mxu0 0.0
  %1687 = vmatprep.subr.mxu0 0.0
  %1688 = vmatpush1.msra.mxu0 0.0
  %1689 = vmatprep.subr.mxu0 0.0
  %1690 = vmatpush1.msra.mxu0 0.0
  %1691 = vmatprep.subr.mxu0 0.0
  %1692 = vmatpush1.msra.mxu0 0.0
  %1693 = vmatprep.subr.mxu0 0.0
  %1694 = vmatpush1.msra.mxu0 0.0
  %1695 = vmatprep.subr.mxu0 0.0
  %1696 = vmatpush1.msra.mxu0 0.0
  %1697 = vmatprep.subr.mxu0 0.0
  %1698 = vmatpush1.msra.mxu0 0.0
  %1699 = vmatprep.subr.mxu0 0.0
  %1700 = vmatpush1.msra.mxu0 0.0
  %1701 = vmatprep.subr.mxu0 0.0
  %1702 = vmatpush1.msra.mxu0 0.0
  %1703 = vmatprep.subr.mxu0 0.0
  %1704 = vmatpush1.msra.mxu0 0.0
  %1705 = vmatprep.subr.mxu0 0.0
  %1706 = vmatpush1.msra.mxu0 0.0
  %1707 = vmatprep.mubr.f32.mxu0 0.0
  %1708 = vmatmul.mubr.f32.gmra.mrb[0].mxu0 %v1569
  %v1709 = vpop.f32.mrb[0].mxu0
  %v1710 = vadd.f32 0.0, %v1709
  %v1711 = vpop.f32.mrb[0].mxu0
  %v1712 = vadd.f32 0.0, %v1711
  %1713 = vdwg.mxu0
  %1714 = vmatprep.subr.mxu0 %v358
  %1715 = vmatpush1.msra.mxu0 %v357
  %1716 = vmatprep.subr.mxu0 %v362
  %1717 = vmatpush1.msra.mxu0 %v361
  %1718 = vmatprep.subr.mxu0 %v366
  %1719 = vmatpush1.msra.mxu0 %v365
  %1720 = vmatprep.subr.mxu0 %v370
  %1721 = vmatpush1.msra.mxu0 %v369
  %1722 = vmatprep.subr.mxu0 %v374
  %1723 = vmatpush1.msra.mxu0 %v373
  %1724 = vmatprep.subr.mxu0 %v378
  %1725 = vmatpush1.msra.mxu0 %v377
  %1726 = vmatprep.subr.mxu0 %v382
  %1727 = vmatpush1.msra.mxu0 %v381
  %1728 = vmatprep.subr.mxu0 %v386
  %1729 = vmatpush1.msra.mxu0 %v385
  %1730 = vmatprep.subr.mxu0 %v390
  %1731 = vmatpush1.msra.mxu0 %v389
  %1732 = vmatprep.subr.mxu0 %v394
  %1733 = vmatpush1.msra.mxu0 %v393
  %1734 = vmatprep.subr.mxu0 %v398
  %1735 = vmatpush1.msra.mxu0 %v397
  %1736 = vmatprep.subr.mxu0 %v402
  %1737 = vmatpush1.msra.mxu0 %v401
  %1738 = vmatprep.subr.mxu0 %v406
  %1739 = vmatpush1.msra.mxu0 %v405
  %1740 = vmatprep.subr.mxu0 %v410
  %1741 = vmatpush1.msra.mxu0 %v409
  %1742 = vmatprep.subr.mxu0 %v414
  %1743 = vmatpush1.msra.mxu0 %v413
  %1744 = vmatprep.subr.mxu0 %v418
  %1745 = vmatpush1.msra.mxu0 %v417
  %1746 = vmatprep.subr.mxu0 0.0
  %1747 = vmatpush1.msra.mxu0 0.0
  %1748 = vmatprep.subr.mxu0 0.0
  %1749 = vmatpush1.msra.mxu0 0.0
  %1750 = vmatprep.subr.mxu0 0.0
  %1751 = vmatpush1.msra.mxu0 0.0
  %1752 = vmatprep.subr.mxu0 0.0
  %1753 = vmatpush1.msra.mxu0 0.0
  %1754 = vmatprep.subr.mxu0 0.0
  %1755 = vmatpush1.msra.mxu0 0.0
  %1756 = vmatprep.subr.mxu0 0.0
  %1757 = vmatpush1.msra.mxu0 0.0
  %1758 = vmatprep.subr.mxu0 0.0
  %1759 = vmatpush1.msra.mxu0 0.0
  %1760 = vmatprep.subr.mxu0 0.0
  %1761 = vmatpush1.msra.mxu0 0.0
  %1762 = vmatprep.subr.mxu0 0.0
  %1763 = vmatpush1.msra.mxu0 0.0
  %1764 = vmatprep.subr.mxu0 0.0
  %1765 = vmatpush1.msra.mxu0 0.0
  %1766 = vmatprep.subr.mxu0 0.0
  %1767 = vmatpush1.msra.mxu0 0.0
  %1768 = vmatprep.subr.mxu0 0.0
  %1769 = vmatpush1.msra.mxu0 0.0
  %1770 = vmatprep.subr.mxu0 0.0
  %1771 = vmatpush1.msra.mxu0 0.0
  %1772 = vmatprep.subr.mxu0 0.0
  %1773 = vmatpush1.msra.mxu0 0.0
  %1774 = vmatprep.subr.mxu0 0.0
  %1775 = vmatpush1.msra.mxu0 0.0
  %1776 = vmatprep.subr.mxu0 0.0
  %1777 = vmatpush1.msra.mxu0 0.0
  %1778 = vmatprep.mubr.f32.mxu0 0.0
  %1779 = vmatmul.mubr.f32.gmra.mrb[0].mxu0 %v1569
  %v1780 = vpop.f32.mrb[0].mxu0
  %v1781 = vadd.f32 0.0, %v1780
  %v1782 = vpop.f32.mrb[0].mxu0
  %v1783 = vadd.f32 0.0, %v1782
  %1784 = vdwg.mxu0
  %v1785 = vadd.f32 %v1639, %v1710
  %v1786 = vadd.f32 %v1640, %v1712
  %v1787 = vadd.f32 %v1641, %v1781
  %v1788 = vadd.f32 %v1642, %v1783
  %v1789 = vxor.u32 %v1785, 2147483648
  %v1790 = vmul.f32 %v1789, 1.442695
  %v1791 = vpow.pop %v1790
  %v1792 = vadd.f32 %v1791, 1.0
  %v1793 = vrcp.pop %v1792
  %v1794 = vmul.f32 1.0, %v1793
  %v1795 = vxor.u32 %v1786, 2147483648
  %v1796 = vmul.f32 %v1795, 1.442695
  %v1797 = vpow.pop %v1796
  %v1798 = vadd.f32 %v1797, 1.0
  %v1799 = vrcp.pop %v1798
  %v1800 = vmul.f32 1.0, %v1799
  %v1801 = vtanh.pop %v1787
  %v1802 = vxor.u32 %v1788, 2147483648
  %v1803 = vmul.f32 %v1802, 1.442695
  %v1804 = vpow.pop %v1803
  %v1805 = vadd.f32 %v1804, 1.0
  %v1806 = vrcp.pop %v1805
  %v1807 = vmul.f32 1.0, %v1806
  %v1808 = vmul.f32 %v1800, %v1567
  %v1809 = vmul.f32 %v1794, %v1801
  %v1810 = vadd.f32 %v1808, %v1809
  %v1811 = vtanh.pop %v1810
  %v1812 = vmul.f32 %v1807, %v1811
  %v1814 = vcombine.high %v1812, %v1812
  %v1816 = vunpack.c.l.s4 1966171168
  %v1817 = vunpack.c.0.s8 %v1816
  %v1818 = vlaneseq
  %v1819 = vshrl.u32 %v1818, 7
  %v1820 = vsub.s32 %v1817, %v1819
  %v1821 = vrot.slane %v1812, %v1820
  %v1823 = vunpack.c.l.s4 1966171168
  %v1824 = vunpack.c.0.s8 %v1823
  %v1825 = vlaneseq
  %v1826 = vshrl.u32 %v1825, 7
  %v1827 = vsub.s32 %v1824, %v1826
  %v1828 = vrot.slane %v1814, %v1827
  %v1829 = vcombine.high %v1821, %v1821
  %v1830 = vcombine.high %v1828, %v1828
  %v1832 = vunpack.c.l.s4 1966171168
  %v1833 = vunpack.c.0.s8 %v1832
  %v1834 = vlaneseq
  %v1835 = vshrl.u32 %v1834, 7
  %v1836 = vsub.s32 %v1833, %v1835
  %v1837 = vrot.slane %v1821, %v1836
  %v1839 = vunpack.c.l.s4 1966171168
  %v1840 = vunpack.c.0.s8 %v1839
  %v1841 = vlaneseq
  %v1842 = vshrl.u32 %v1841, 7
  %v1843 = vsub.s32 %v1840, %v1842
  %v1844 = vrot.slane %v1828, %v1843
  %v1846 = vunpack.c.l.s4 1966171168
  %v1847 = vunpack.c.0.s8 %v1846
  %v1848 = vlaneseq
  %v1849 = vshrl.u32 %v1848, 7
  %v1850 = vsub.s32 %v1847, %v1849
  %v1851 = vrot.slane %v1829, %v1850
  %v1853 = vunpack.c.l.s4 1966171168
  %v1854 = vunpack.c.0.s8 %v1853
  %v1855 = vlaneseq
  %v1856 = vshrl.u32 %v1855, 7
  %v1857 = vsub.s32 %v1854, %v1856
  %v1858 = vrot.slane %v1830, %v1857
  %v1859 = vcombine.high %v1837, %v1837
  %v1860 = vcombine.high %v1844, %v1844
  %v1861 = vcombine.high %v1851, %v1851
  %v1862 = vcombine.high %v1858, %v1858
  %1871 = vst [vmem:[%s4 + $0x5] sm:$0x1] %v1837
  %1872 = vst [vmem:[%s4 + $0xd] sm:$0x1] %v1851
  %1873 = vst [vmem:[%s4 + $0x15] sm:$0x1] %v1859
  %1874 = vst [vmem:[%s4 + $0x1d] sm:$0x1] %v1861
  %1875 = vst [vmem:[%s4 + $0x25] sm:$0x1] %v1844
  %1876 = vst [vmem:[%s4 + $0x2d] sm:$0x1] %v1858
  %1877 = vst [vmem:[%s4 + $0x35] sm:$0x1] %v1860
  %1878 = vst [vmem:[%s4 + $0x3d] sm:$0x1] %v1862
  %s1879 = smul.u32 6, 4
  %s1880 = smul.addr %s1879, 8
  %s1881 = scalar_lea.vmem [#allocation2], %s1880
  %v1882 = vld [vmem:[%s1881] sm:$0xff]
  %v1883 = vld [vmem:[%s1881 + $0x8] sm:$0xff]
  %v1884 = vld [vmem:[%s1881 + $0x10] sm:$0xff]
  %v1885 = vld [vmem:[%s1881 + $0x18] sm:$0xff]
  %1886 = vmatprep.subr.mxu0 %v356
  %1887 = vmatpush1.msra.mxu0 %v355
  %1888 = vmatprep.subr.mxu0 %v360
  %1889 = vmatpush1.msra.mxu0 %v359
  %1890 = vmatprep.subr.mxu0 %v364
  %1891 = vmatpush1.msra.mxu0 %v363
  %1892 = vmatprep.subr.mxu0 %v368
  %1893 = vmatpush1.msra.mxu0 %v367
  %1894 = vmatprep.subr.mxu0 %v372
  %1895 = vmatpush1.msra.mxu0 %v371
  %1896 = vmatprep.subr.mxu0 %v376
  %1897 = vmatpush1.msra.mxu0 %v375
  %1898 = vmatprep.subr.mxu0 %v380
  %1899 = vmatpush1.msra.mxu0 %v379
  %1900 = vmatprep.subr.mxu0 %v384
  %1901 = vmatpush1.msra.mxu0 %v383
  %1902 = vmatprep.subr.mxu0 %v388
  %1903 = vmatpush1.msra.mxu0 %v387
  %1904 = vmatprep.subr.mxu0 %v392
  %1905 = vmatpush1.msra.mxu0 %v391
  %1906 = vmatprep.subr.mxu0 %v396
  %1907 = vmatpush1.msra.mxu0 %v395
  %1908 = vmatprep.subr.mxu0 %v400
  %1909 = vmatpush1.msra.mxu0 %v399
  %1910 = vmatprep.subr.mxu0 %v404
  %1911 = vmatpush1.msra.mxu0 %v403
  %1912 = vmatprep.subr.mxu0 %v408
  %1913 = vmatpush1.msra.mxu0 %v407
  %1914 = vmatprep.subr.mxu0 %v412
  %1915 = vmatpush1.msra.mxu0 %v411
  %1916 = vmatprep.subr.mxu0 %v416
  %1917 = vmatpush1.msra.mxu0 %v415
  %1918 = vmatprep.subr.mxu0 0.0
  %1919 = vmatpush1.msra.mxu0 0.0
  %1920 = vmatprep.subr.mxu0 0.0
  %1921 = vmatpush1.msra.mxu0 0.0
  %1922 = vmatprep.subr.mxu0 0.0
  %1923 = vmatpush1.msra.mxu0 0.0
  %1924 = vmatprep.subr.mxu0 0.0
  %1925 = vmatpush1.msra.mxu0 0.0
  %1926 = vmatprep.subr.mxu0 0.0
  %1927 = vmatpush1.msra.mxu0 0.0
  %1928 = vmatprep.subr.mxu0 0.0
  %1929 = vmatpush1.msra.mxu0 0.0
  %1930 = vmatprep.subr.mxu0 0.0
  %1931 = vmatpush1.msra.mxu0 0.0
  %1932 = vmatprep.subr.mxu0 0.0
  %1933 = vmatpush1.msra.mxu0 0.0
  %1934 = vmatprep.subr.mxu0 0.0
  %1935 = vmatpush1.msra.mxu0 0.0
  %1936 = vmatprep.subr.mxu0 0.0
  %1937 = vmatpush1.msra.mxu0 0.0
  %1938 = vmatprep.subr.mxu0 0.0
  %1939 = vmatpush1.msra.mxu0 0.0
  %1940 = vmatprep.subr.mxu0 0.0
  %1941 = vmatpush1.msra.mxu0 0.0
  %1942 = vmatprep.subr.mxu0 0.0
  %1943 = vmatpush1.msra.mxu0 0.0
  %1944 = vmatprep.subr.mxu0 0.0
  %1945 = vmatpush1.msra.mxu0 0.0
  %1946 = vmatprep.subr.mxu0 0.0
  %1947 = vmatpush1.msra.mxu0 0.0
  %1948 = vmatprep.subr.mxu0 0.0
  %1949 = vmatpush1.msra.mxu0 0.0
  %1950 = vmatprep.mubr.f32.mxu0 0.0
  %1951 = vmatmul.mubr.f32.gmra.mrb[0].mxu0 %v1812
  %v1952 = vpop.f32.mrb[0].mxu0
  %v1953 = vadd.f32 0.0, %v1952
  %v1954 = vpop.f32.mrb[0].mxu0
  %v1955 = vadd.f32 0.0, %v1954
  %1956 = vdwg.mxu0
  %1957 = vmatprep.subr.mxu0 %v358
  %1958 = vmatpush1.msra.mxu0 %v357
  %1959 = vmatprep.subr.mxu0 %v362
  %1960 = vmatpush1.msra.mxu0 %v361
  %1961 = vmatprep.subr.mxu0 %v366
  %1962 = vmatpush1.msra.mxu0 %v365
  %1963 = vmatprep.subr.mxu0 %v370
  %1964 = vmatpush1.msra.mxu0 %v369
  %1965 = vmatprep.subr.mxu0 %v374
  %1966 = vmatpush1.msra.mxu0 %v373
  %1967 = vmatprep.subr.mxu0 %v378
  %1968 = vmatpush1.msra.mxu0 %v377
  %1969 = vmatprep.subr.mxu0 %v382
  %1970 = vmatpush1.msra.mxu0 %v381
  %1971 = vmatprep.subr.mxu0 %v386
  %1972 = vmatpush1.msra.mxu0 %v385
  %1973 = vmatprep.subr.mxu0 %v390
  %1974 = vmatpush1.msra.mxu0 %v389
  %1975 = vmatprep.subr.mxu0 %v394
  %1976 = vmatpush1.msra.mxu0 %v393
  %1977 = vmatprep.subr.mxu0 %v398
  %1978 = vmatpush1.msra.mxu0 %v397
  %1979 = vmatprep.subr.mxu0 %v402
  %1980 = vmatpush1.msra.mxu0 %v401
  %1981 = vmatprep.subr.mxu0 %v406
  %1982 = vmatpush1.msra.mxu0 %v405
  %1983 = vmatprep.subr.mxu0 %v410
  %1984 = vmatpush1.msra.mxu0 %v409
  %1985 = vmatprep.subr.mxu0 %v414
  %1986 = vmatpush1.msra.mxu0 %v413
  %1987 = vmatprep.subr.mxu0 %v418
  %1988 = vmatpush1.msra.mxu0 %v417
  %1989 = vmatprep.subr.mxu0 0.0
  %1990 = vmatpush1.msra.mxu0 0.0
  %1991 = vmatprep.subr.mxu0 0.0
  %1992 = vmatpush1.msra.mxu0 0.0
  %1993 = vmatprep.subr.mxu0 0.0
  %1994 = vmatpush1.msra.mxu0 0.0
  %1995 = vmatprep.subr.mxu0 0.0
  %1996 = vmatpush1.msra.mxu0 0.0
  %1997 = vmatprep.subr.mxu0 0.0
  %1998 = vmatpush1.msra.mxu0 0.0
  %1999 = vmatprep.subr.mxu0 0.0
  %2000 = vmatpush1.msra.mxu0 0.0
  %2001 = vmatprep.subr.mxu0 0.0
  %2002 = vmatpush1.msra.mxu0 0.0
  %2003 = vmatprep.subr.mxu0 0.0
  %2004 = vmatpush1.msra.mxu0 0.0
  %2005 = vmatprep.subr.mxu0 0.0
  %2006 = vmatpush1.msra.mxu0 0.0
  %2007 = vmatprep.subr.mxu0 0.0
  %2008 = vmatpush1.msra.mxu0 0.0
  %2009 = vmatprep.subr.mxu0 0.0
  %2010 = vmatpush1.msra.mxu0 0.0
  %2011 = vmatprep.subr.mxu0 0.0
  %2012 = vmatpush1.msra.mxu0 0.0
  %2013 = vmatprep.subr.mxu0 0.0
  %2014 = vmatpush1.msra.mxu0 0.0
  %2015 = vmatprep.subr.mxu0 0.0
  %2016 = vmatpush1.msra.mxu0 0.0
  %2017 = vmatprep.subr.mxu0 0.0
  %2018 = vmatpush1.msra.mxu0 0.0
  %2019 = vmatprep.subr.mxu0 0.0
  %2020 = vmatpush1.msra.mxu0 0.0
  %2021 = vmatprep.mubr.f32.mxu0 0.0
  %2022 = vmatmul.mubr.f32.gmra.mrb[0].mxu0 %v1812
  %v2023 = vpop.f32.mrb[0].mxu0
  %v2024 = vadd.f32 0.0, %v2023
  %v2025 = vpop.f32.mrb[0].mxu0
  %v2026 = vadd.f32 0.0, %v2025
  %2027 = vdwg.mxu0
  %v2028 = vadd.f32 %v1882, %v1953
  %v2029 = vadd.f32 %v1883, %v1955
  %v2030 = vadd.f32 %v1884, %v2024
  %v2031 = vadd.f32 %v1885, %v2026
  %v2032 = vxor.u32 %v2028, 2147483648
  %v2033 = vmul.f32 %v2032, 1.442695
  %v2034 = vpow.pop %v2033
  %v2035 = vadd.f32 %v2034, 1.0
  %v2036 = vrcp.pop %v2035
  %v2037 = vmul.f32 1.0, %v2036
  %v2038 = vxor.u32 %v2029, 2147483648
  %v2039 = vmul.f32 %v2038, 1.442695
  %v2040 = vpow.pop %v2039
  %v2041 = vadd.f32 %v2040, 1.0
  %v2042 = vrcp.pop %v2041
  %v2043 = vmul.f32 1.0, %v2042
  %v2044 = vtanh.pop %v2030
  %v2045 = vxor.u32 %v2031, 2147483648
  %v2046 = vmul.f32 %v2045, 1.442695
  %v2047 = vpow.pop %v2046
  %v2048 = vadd.f32 %v2047, 1.0
  %v2049 = vrcp.pop %v2048
  %v2050 = vmul.f32 1.0, %v2049
  %v2051 = vmul.f32 %v2043, %v1810
  %v2052 = vmul.f32 %v2037, %v2044
  %v2053 = vadd.f32 %v2051, %v2052
  %v2054 = vtanh.pop %v2053
  %v2055 = vmul.f32 %v2050, %v2054
  %v2057 = vcombine.high %v2055, %v2055
  %v2059 = vunpack.c.l.s4 1966171168
  %v2060 = vunpack.c.0.s8 %v2059
  %v2061 = vlaneseq
  %v2062 = vshrl.u32 %v2061, 7
  %v2063 = vsub.s32 %v2060, %v2062
  %v2064 = vrot.slane %v2055, %v2063
  %v2066 = vunpack.c.l.s4 1966171168
  %v2067 = vunpack.c.0.s8 %v2066
  %v2068 = vlaneseq
  %v2069 = vshrl.u32 %v2068, 7
  %v2070 = vsub.s32 %v2067, %v2069
  %v2071 = vrot.slane %v2057, %v2070
  %v2072 = vcombine.high %v2064, %v2064
  %v2073 = vcombine.high %v2071, %v2071
  %v2075 = vunpack.c.l.s4 1966171168
  %v2076 = vunpack.c.0.s8 %v2075
  %v2077 = vlaneseq
  %v2078 = vshrl.u32 %v2077, 7
  %v2079 = vsub.s32 %v2076, %v2078
  %v2080 = vrot.slane %v2064, %v2079
  %v2082 = vunpack.c.l.s4 1966171168
  %v2083 = vunpack.c.0.s8 %v2082
  %v2084 = vlaneseq
  %v2085 = vshrl.u32 %v2084, 7
  %v2086 = vsub.s32 %v2083, %v2085
  %v2087 = vrot.slane %v2071, %v2086
  %v2089 = vunpack.c.l.s4 1966171168
  %v2090 = vunpack.c.0.s8 %v2089
  %v2091 = vlaneseq
  %v2092 = vshrl.u32 %v2091, 7
  %v2093 = vsub.s32 %v2090, %v2092
  %v2094 = vrot.slane %v2072, %v2093
  %v2096 = vunpack.c.l.s4 1966171168
  %v2097 = vunpack.c.0.s8 %v2096
  %v2098 = vlaneseq
  %v2099 = vshrl.u32 %v2098, 7
  %v2100 = vsub.s32 %v2097, %v2099
  %v2101 = vrot.slane %v2073, %v2100
  %v2102 = vcombine.high %v2080, %v2080
  %v2103 = vcombine.high %v2087, %v2087
  %v2104 = vcombine.high %v2094, %v2094
  %v2105 = vcombine.high %v2101, %v2101
  %2114 = vst [vmem:[%s4 + $0x6] sm:$0x1] %v2080
  %2115 = vst [vmem:[%s4 + $0xe] sm:$0x1] %v2094
  %2116 = vst [vmem:[%s4 + $0x16] sm:$0x1] %v2102
  %2117 = vst [vmem:[%s4 + $0x1e] sm:$0x1] %v2104
  %2118 = vst [vmem:[%s4 + $0x26] sm:$0x1] %v2087
  %2119 = vst [vmem:[%s4 + $0x2e] sm:$0x1] %v2101
  %2120 = vst [vmem:[%s4 + $0x36] sm:$0x1] %v2103
  %2121 = vst [vmem:[%s4 + $0x3e] sm:$0x1] %v2105
  %s2122 = smul.u32 7, 4
  %s2123 = smul.addr %s2122, 8
  %s2124 = scalar_lea.vmem [#allocation2], %s2123
  %v2125 = vld [vmem:[%s2124] sm:$0xff]
  %v2126 = vld [vmem:[%s2124 + $0x8] sm:$0xff]
  %v2127 = vld [vmem:[%s2124 + $0x10] sm:$0xff]
  %v2128 = vld [vmem:[%s2124 + $0x18] sm:$0xff]
  %2129 = vmatprep.subr.mxu0 %v356
  %2130 = vmatpush1.msra.mxu0 %v355
  %2131 = vmatprep.subr.mxu0 %v360
  %2132 = vmatpush1.msra.mxu0 %v359
  %2133 = vmatprep.subr.mxu0 %v364
  %2134 = vmatpush1.msra.mxu0 %v363
  %2135 = vmatprep.subr.mxu0 %v368
  %2136 = vmatpush1.msra.mxu0 %v367
  %2137 = vmatprep.subr.mxu0 %v372
  %2138 = vmatpush1.msra.mxu0 %v371
  %2139 = vmatprep.subr.mxu0 %v376
  %2140 = vmatpush1.msra.mxu0 %v375
  %2141 = vmatprep.subr.mxu0 %v380
  %2142 = vmatpush1.msra.mxu0 %v379
  %2143 = vmatprep.subr.mxu0 %v384
  %2144 = vmatpush1.msra.mxu0 %v383
  %2145 = vmatprep.subr.mxu0 %v388
  %2146 = vmatpush1.msra.mxu0 %v387
  %2147 = vmatprep.subr.mxu0 %v392
  %2148 = vmatpush1.msra.mxu0 %v391
  %2149 = vmatprep.subr.mxu0 %v396
  %2150 = vmatpush1.msra.mxu0 %v395
  %2151 = vmatprep.subr.mxu0 %v400
  %2152 = vmatpush1.msra.mxu0 %v399
  %2153 = vmatprep.subr.mxu0 %v404
  %2154 = vmatpush1.msra.mxu0 %v403
  %2155 = vmatprep.subr.mxu0 %v408
  %2156 = vmatpush1.msra.mxu0 %v407
  %2157 = vmatprep.subr.mxu0 %v412
  %2158 = vmatpush1.msra.mxu0 %v411
  %2159 = vmatprep.subr.mxu0 %v416
  %2160 = vmatpush1.msra.mxu0 %v415
  %2161 = vmatprep.subr.mxu0 0.0
  %2162 = vmatpush1.msra.mxu0 0.0
  %2163 = vmatprep.subr.mxu0 0.0
  %2164 = vmatpush1.msra.mxu0 0.0
  %2165 = vmatprep.subr.mxu0 0.0
  %2166 = vmatpush1.msra.mxu0 0.0
  %2167 = vmatprep.subr.mxu0 0.0
  %2168 = vmatpush1.msra.mxu0 0.0
  %2169 = vmatprep.subr.mxu0 0.0
  %2170 = vmatpush1.msra.mxu0 0.0
  %2171 = vmatprep.subr.mxu0 0.0
  %2172 = vmatpush1.msra.mxu0 0.0
  %2173 = vmatprep.subr.mxu0 0.0
  %2174 = vmatpush1.msra.mxu0 0.0
  %2175 = vmatprep.subr.mxu0 0.0
  %2176 = vmatpush1.msra.mxu0 0.0
  %2177 = vmatprep.subr.mxu0 0.0
  %2178 = vmatpush1.msra.mxu0 0.0
  %2179 = vmatprep.subr.mxu0 0.0
  %2180 = vmatpush1.msra.mxu0 0.0
  %2181 = vmatprep.subr.mxu0 0.0
  %2182 = vmatpush1.msra.mxu0 0.0
  %2183 = vmatprep.subr.mxu0 0.0
  %2184 = vmatpush1.msra.mxu0 0.0
  %2185 = vmatprep.subr.mxu0 0.0
  %2186 = vmatpush1.msra.mxu0 0.0
  %2187 = vmatprep.subr.mxu0 0.0
  %2188 = vmatpush1.msra.mxu0 0.0
  %2189 = vmatprep.subr.mxu0 0.0
  %2190 = vmatpush1.msra.mxu0 0.0
  %2191 = vmatprep.subr.mxu0 0.0
  %2192 = vmatpush1.msra.mxu0 0.0
  %2193 = vmatprep.mubr.f32.mxu0 0.0
  %2194 = vmatmul.mubr.f32.gmra.mrb[0].mxu0 %v2055
  %v2195 = vpop.f32.mrb[0].mxu0
  %v2196 = vadd.f32 0.0, %v2195
  %v2197 = vpop.f32.mrb[0].mxu0
  %v2198 = vadd.f32 0.0, %v2197
  %2199 = vdwg.mxu0
  %2200 = vmatprep.subr.mxu0 %v358
  %2201 = vmatpush1.msra.mxu0 %v357
  %2202 = vmatprep.subr.mxu0 %v362
  %2203 = vmatpush1.msra.mxu0 %v361
  %2204 = vmatprep.subr.mxu0 %v366
  %2205 = vmatpush1.msra.mxu0 %v365
  %2206 = vmatprep.subr.mxu0 %v370
  %2207 = vmatpush1.msra.mxu0 %v369
  %2208 = vmatprep.subr.mxu0 %v374
  %2209 = vmatpush1.msra.mxu0 %v373
  %2210 = vmatprep.subr.mxu0 %v378
  %2211 = vmatpush1.msra.mxu0 %v377
  %2212 = vmatprep.subr.mxu0 %v382
  %2213 = vmatpush1.msra.mxu0 %v381
  %2214 = vmatprep.subr.mxu0 %v386
  %2215 = vmatpush1.msra.mxu0 %v385
  %2216 = vmatprep.subr.mxu0 %v390
  %2217 = vmatpush1.msra.mxu0 %v389
  %2218 = vmatprep.subr.mxu0 %v394
  %2219 = vmatpush1.msra.mxu0 %v393
  %2220 = vmatprep.subr.mxu0 %v398
  %2221 = vmatpush1.msra.mxu0 %v397
  %2222 = vmatprep.subr.mxu0 %v402
  %2223 = vmatpush1.msra.mxu0 %v401
  %2224 = vmatprep.subr.mxu0 %v406
  %2225 = vmatpush1.msra.mxu0 %v405
  %2226 = vmatprep.subr.mxu0 %v410
  %2227 = vmatpush1.msra.mxu0 %v409
  %2228 = vmatprep.subr.mxu0 %v414
  %2229 = vmatpush1.msra.mxu0 %v413
  %2230 = vmatprep.subr.mxu0 %v418
  %2231 = vmatpush1.msra.mxu0 %v417
  %2232 = vmatprep.subr.mxu0 0.0
  %2233 = vmatpush1.msra.mxu0 0.0
  %2234 = vmatprep.subr.mxu0 0.0
  %2235 = vmatpush1.msra.mxu0 0.0
  %2236 = vmatprep.subr.mxu0 0.0
  %2237 = vmatpush1.msra.mxu0 0.0
  %2238 = vmatprep.subr.mxu0 0.0
  %2239 = vmatpush1.msra.mxu0 0.0
  %2240 = vmatprep.subr.mxu0 0.0
  %2241 = vmatpush1.msra.mxu0 0.0
  %2242 = vmatprep.subr.mxu0 0.0
  %2243 = vmatpush1.msra.mxu0 0.0
  %2244 = vmatprep.subr.mxu0 0.0
  %2245 = vmatpush1.msra.mxu0 0.0
  %2246 = vmatprep.subr.mxu0 0.0
  %2247 = vmatpush1.msra.mxu0 0.0
  %2248 = vmatprep.subr.mxu0 0.0
  %2249 = vmatpush1.msra.mxu0 0.0
  %2250 = vmatprep.subr.mxu0 0.0
  %2251 = vmatpush1.msra.mxu0 0.0
  %2252 = vmatprep.subr.mxu0 0.0
  %2253 = vmatpush1.msra.mxu0 0.0
  %2254 = vmatprep.subr.mxu0 0.0
  %2255 = vmatpush1.msra.mxu0 0.0
  %2256 = vmatprep.subr.mxu0 0.0
  %2257 = vmatpush1.msra.mxu0 0.0
  %2258 = vmatprep.subr.mxu0 0.0
  %2259 = vmatpush1.msra.mxu0 0.0
  %2260 = vmatprep.subr.mxu0 0.0
  %2261 = vmatpush1.msra.mxu0 0.0
  %2262 = vmatprep.subr.mxu0 0.0
  %2263 = vmatpush1.msra.mxu0 0.0
  %2264 = vmatprep.mubr.f32.mxu0 0.0
  %2265 = vmatmul.mubr.f32.gmra.mrb[0].mxu0 %v2055
  %v2266 = vpop.f32.mrb[0].mxu0
  %v2267 = vadd.f32 0.0, %v2266
  %v2268 = vpop.f32.mrb[0].mxu0
  %v2269 = vadd.f32 0.0, %v2268
  %2270 = vdwg.mxu0
  %v2271 = vadd.f32 %v2125, %v2196
  %v2272 = vadd.f32 %v2126, %v2198
  %v2273 = vadd.f32 %v2127, %v2267
  %v2274 = vadd.f32 %v2128, %v2269
  %v2275 = vxor.u32 %v2271, 2147483648
  %v2276 = vmul.f32 %v2275, 1.442695
  %v2277 = vpow.pop %v2276
  %v2278 = vadd.f32 %v2277, 1.0
  %v2279 = vrcp.pop %v2278
  %v2280 = vmul.f32 1.0, %v2279
  %v2281 = vxor.u32 %v2272, 2147483648
  %v2282 = vmul.f32 %v2281, 1.442695
  %v2283 = vpow.pop %v2282
  %v2284 = vadd.f32 %v2283, 1.0
  %v2285 = vrcp.pop %v2284
  %v2286 = vmul.f32 1.0, %v2285
  %v2287 = vtanh.pop %v2273
  %v2288 = vxor.u32 %v2274, 2147483648
  %v2289 = vmul.f32 %v2288, 1.442695
  %v2290 = vpow.pop %v2289
  %v2291 = vadd.f32 %v2290, 1.0
  %v2292 = vrcp.pop %v2291
  %v2293 = vmul.f32 1.0, %v2292
  %v2294 = vmul.f32 %v2286, %v2053
  %v2295 = vmul.f32 %v2280, %v2287
  %v2296 = vadd.f32 %v2294, %v2295
  %v2297 = vtanh.pop %v2296
  %v2298 = vmul.f32 %v2293, %v2297
  %v2300 = vcombine.high %v2298, %v2298
  %v2302 = vunpack.c.l.s4 1966171168
  %v2303 = vunpack.c.0.s8 %v2302
  %v2304 = vlaneseq
  %v2305 = vshrl.u32 %v2304, 7
  %v2306 = vsub.s32 %v2303, %v2305
  %v2307 = vrot.slane %v2298, %v2306
  %v2309 = vunpack.c.l.s4 1966171168
  %v2310 = vunpack.c.0.s8 %v2309
  %v2311 = vlaneseq
  %v2312 = vshrl.u32 %v2311, 7
  %v2313 = vsub.s32 %v2310, %v2312
  %v2314 = vrot.slane %v2300, %v2313
  %v2315 = vcombine.high %v2307, %v2307
  %v2316 = vcombine.high %v2314, %v2314
  %v2318 = vunpack.c.l.s4 1966171168
  %v2319 = vunpack.c.0.s8 %v2318
  %v2320 = vlaneseq
  %v2321 = vshrl.u32 %v2320, 7
  %v2322 = vsub.s32 %v2319, %v2321
  %v2323 = vrot.slane %v2307, %v2322
  %v2325 = vunpack.c.l.s4 1966171168
  %v2326 = vunpack.c.0.s8 %v2325
  %v2327 = vlaneseq
  %v2328 = vshrl.u32 %v2327, 7
  %v2329 = vsub.s32 %v2326, %v2328
  %v2330 = vrot.slane %v2314, %v2329
  %v2332 = vunpack.c.l.s4 1966171168
  %v2333 = vunpack.c.0.s8 %v2332
  %v2334 = vlaneseq
  %v2335 = vshrl.u32 %v2334, 7
  %v2336 = vsub.s32 %v2333, %v2335
  %v2337 = vrot.slane %v2315, %v2336
  %v2339 = vunpack.c.l.s4 1966171168
  %v2340 = vunpack.c.0.s8 %v2339
  %v2341 = vlaneseq
  %v2342 = vshrl.u32 %v2341, 7
  %v2343 = vsub.s32 %v2340, %v2342
  %v2344 = vrot.slane %v2316, %v2343
  %v2345 = vcombine.high %v2323, %v2323
  %v2346 = vcombine.high %v2330, %v2330
  %v2347 = vcombine.high %v2337, %v2337
  %v2348 = vcombine.high %v2344, %v2344
  %2357 = vst [vmem:[%s4 + $0x7] sm:$0x1] %v2323
  %2358 = vst [vmem:[%s4 + $0xf] sm:$0x1] %v2337
  %2359 = vst [vmem:[%s4 + $0x17] sm:$0x1] %v2345
  %2360 = vst [vmem:[%s4 + $0x1f] sm:$0x1] %v2347
  %2361 = vst [vmem:[%s4 + $0x27] sm:$0x1] %v2330
  %2362 = vst [vmem:[%s4 + $0x2f] sm:$0x1] %v2344
  %2363 = vst [vmem:[%s4 + $0x37] sm:$0x1] %v2346
  %2364 = vst [vmem:[%s4 + $0x3f] sm:$0x1] %v2348
  %2365 = vst [vmem:[%s5] sm:$0xff] %v2298
  %2366 = vst [vmem:[%s6] sm:$0xff] %v2296
  // Predicated region
  $region22: #{encoder_forward.1} parent=0 // pred_check
    _
  $region23: #{encoder_forward.1} parent=0 // pred_check_branch
    %2368 = sbr.rel (0) target = $region25
  $region24: #{encoder_forward.1} parent=0 // pred_region
    _
  $region25: #{encoder_forward.1} parent=0 // pred_fallthru
    _
  // Predicated region
  $region26: #{encoder_forward.1} parent=0 // pred_check
    _
  $region27: #{encoder_forward.1} parent=0 // pred_check_branch
    %2370 = sbr.rel (0) target = $region29
  $region28: #{encoder_forward.1} parent=0 // pred_region
    _
  $region29: #{encoder_forward.1} parent=0 // pred_fallthru
    _
  // Predicated region
  $region30: #{encoder_forward.1} parent=0 // pred_check
    _
  $region31: #{encoder_forward.1} parent=0 // pred_check_branch
    %2372 = sbr.rel (0) target = $region33
  $region32: #{encoder_forward.1} parent=0 // pred_region
    _
  $region33: #{encoder_forward.1} parent=0 // pred_fallthru
    _
  // Predicated region
  $region34: #{encoder_forward.1} parent=0 // pred_check
    _
  $region35: #{encoder_forward.1} parent=0 // pred_check_branch
    %2374 = sbr.rel (0) target = $region37
  $region36: #{encoder_forward.1} parent=0 // pred_region
    _
  $region37: #{encoder_forward.1} parent=0 // pred_fallthru
    _
  // Predicated region
  $region38: #{encoder_forward.1} parent=0 // pred_check
    _
  $region39: #{encoder_forward.1} parent=0 // pred_check_branch
    %2376 = sbr.rel (0) target = $region41
  $region40: #{encoder_forward.1} parent=0 // pred_region
    _
  $region41: #{encoder_forward.1} parent=0 // pred_fallthru
    _
  // Predicated region
  $region42: #{encoder_forward.1} parent=0 // pred_check
    _
  $region43: #{encoder_forward.1} parent=0 // pred_check_branch
    %2378 = sbr.rel (0) target = $region45
  $region44: #{encoder_forward.1} parent=0 // pred_region
    _
  $region45: #{encoder_forward.1} parent=0 // pred_fallthru
    _

</llo_original>
